<compile_context>
chip_gen: v7x
topology: tpu7x:2x2x1
jax: 0.10.0
libtpu: 0.0.40
codegen_flags: <defaults>
</compile_context>

<pallas_src>
import functools
import math

import jax
import jax.numpy as jnp
from jax import lax
from jax.experimental import pallas as pl
from jax.experimental.pallas import tpu as pltpu  # noqa: F401  (kept for interpret/debug use)

NEG_FILL = -9e15  # matches torch.full(..., -9000000000000000.0)


def mha_kernel(x_ref, pm_ref, wqkv_ref, bqkv_ref, wo_ref, bo_ref, o_ref, *,
               batch, seq, num_heads, head_dim, embed_dim, window_size):
    """Single kernel invocation handles all batches (B is tiny)."""
    E = embed_dim
    S = seq

    # ---- fused QKV projection for all batches: (B*S, Din) @ (Din, 3E) -------
    x = x_ref[...]                                                   # (B*S, Din)
    qkv = jnp.dot(x, wqkv_ref[...],
                  preferred_element_type=jnp.float32) + bqkv_ref[...]  # (B*S, 3E)
    q = qkv[:, :E]          # pre-scaled by 1/sqrt(head_dim) via the weights
    k = qkv[:, E:2 * E]
    v = qkv[:, 2 * E:]

    wo = wo_ref[...]        # (E, E) = Wo^T
    pm = pm_ref[...]        # (B, S)

    # Sliding-window band mask |i - j| <= window_size // 2, built in-kernel
    # from 2-D iotas (no DMA, no resident (S,S) array).
    row = lax.broadcasted_iota(jnp.int32, (S, S), 0)
    col = lax.broadcasted_iota(jnp.int32, (S, S), 1)
    band = jnp.abs(row - col) <= (window_size // 2)                  # (S, S)

    outs = []
    for b in range(batch):                       # static unroll (B = 2)
        r0 = b * S
        qb = q[r0:r0 + S, :]                                         # (S, E)
        kb = k[r0:r0 + S, :]
        vb = v[r0:r0 + S, :]

        # Combined band + key-padding mask; select-based (NOT additive bias) so
        # fully-masked rows still softmax to uniform, matching the reference.
        key_ok = pm[b:b + 1, :] != 0.0                               # (1, S)
        mask = jnp.logical_and(band, key_ok)                         # (S, S)

        acc = jnp.zeros((S, E), jnp.float32)
        for h in range(num_heads):               # static unroll over heads
            lo = h * head_dim
            hi = lo + head_dim
            qh = qb[:, lo:hi]                                        # (S, hd)
            kh = kb[:, lo:hi]
            vh = vb[:, lo:hi]

            # Contract directly on the head dim -> no materialized kh.T.
            scores = lax.dot_general(
                qh, kh, dimension_numbers=(((1,), (1,)), ((), ())),
                preferred_element_type=jnp.float32)                  # (S, S)
            att = jnp.where(mask, scores, NEG_FILL)

            # Explicit softmax; (S,1) reciprocal + (S,S) multiply.
            m = jnp.max(att, axis=-1, keepdims=True)
            p = jnp.exp(att - m)
            denom = jnp.sum(p, axis=-1, keepdims=True)
            att = p * pl.reciprocal(denom, approx=False)

            head_out = jnp.dot(att, vh,
                               preferred_element_type=jnp.float32)   # (S, hd)
            # Output projection folded into the head loop: accumulate in vregs,
            # no (S, E) VMEM slab / masked-store round trip.
            acc = acc + jnp.dot(head_out, wo[lo:hi, :],
                                preferred_element_type=jnp.float32)  # (S, E)
        outs.append(acc)

    # Single contiguous (B*S, E) writeback + bias add.
    o_ref[...] = jnp.concatenate(outs, axis=0) + bo_ref[...]


def multi_head_attention(x, padding_mask, params, *, num_heads, window_size):
    B, S, Din = x.shape
    E = params["wo"].shape[0]
    head_dim = E // num_heads
    scale = 1.0 / math.sqrt(head_dim)

    # ---- trace-time weight preparation (zero kernel cost) -------------------
    # PyTorch qkv_proj output layout: per head h the columns are [q_h|k_h|v_h]
    # interleaved.  Permute to [Q | K | V] contiguous blocks (head-major) and
    # fold the attention scale into the Q columns (weight and bias).
    h_idx = jnp.repeat(jnp.arange(num_heads), head_dim)
    d_idx = jnp.tile(jnp.arange(head_dim), num_heads)
    q_cols = h_idx * (3 * head_dim) + d_idx                    # (E,)
    perm = jnp.concatenate([q_cols, q_cols + head_dim, q_cols + 2 * head_dim])

    col_scale = jnp.concatenate([jnp.full((E,), scale, jnp.float32),
                                 jnp.ones((2 * E,), jnp.float32)])

    wqkv_t = params["wqkv"].T[:, perm] * col_scale[None, :]    # (Din, 3E)
    bqkv = (params["bqkv"][perm] * col_scale)[None, :]         # (1, 3E)
    wo_t = params["wo"].T                                      # (E, E)
    bo = params["bo"][None, :]                                 # (1, E)

    x_flat = x.reshape(B * S, Din)                             # one wide matmul
    pm = padding_mask.astype(jnp.float32)                      # (B, S), one tiny DMA

    kernel = functools.partial(
        mha_kernel, batch=B, seq=S, num_heads=num_heads,
        head_dim=head_dim, embed_dim=E, window_size=window_size)

    # Grid-less call: every operand is a full-array VMEM block, one step, one
    # set of DMAs.  (At realistic S this becomes a flash-style band-tiled grid.)
    out = pl.pallas_call(
        kernel,
        out_shape=jax.ShapeDtypeStruct((B * S, E), jnp.float32),
    )(x_flat, pm, wqkv_t, bqkv, wo_t, bo)
    return out.reshape(B, S, E)


# ---------------- pure-JAX reference (mirrors the PyTorch module) -------------
def reference(x, padding_mask, params, *, num_heads, window_size):
    B, S, Din = x.shape
    E = params["wo"].shape[0]
    hd = E // num_heads
    qkv = x @ params["wqkv"].T + params["bqkv"]
    qkv = qkv.reshape(B, S, num_heads, 3 * hd).transpose(0, 2, 1, 3)
    q, k, v = jnp.split(qkv, 3, axis=-1)
    idx = jnp.arange(S)
    band = jnp.abs(idx[:, None] - idx[None, :]) <= window_size // 2
    scores = jnp.einsum('bhqd,bhkd->bhqk', q, k)
    att = jnp.where(band[None, None], scores, NEG_FILL)
    att = jnp.where((padding_mask != 0)[:, None, None, :], att, NEG_FILL)
    att = att / math.sqrt(hd)
    att = jax.nn.softmax(att, axis=-1)
    vals = jnp.einsum('bhqk,bhkd->bhqd', att, v)
    vals = vals.transpose(0, 2, 1, 3).reshape(B, S, E)
    return vals @ params["wo"].T + params["bo"]


def xavier_uniform(key, shape):
    fan_out, fan_in = shape
    bound = math.sqrt(6.0 / (fan_in + fan_out))
    return jax.random.uniform(key, shape, jnp.float32, -bound, bound)


if __name__ == "__main__":
    # Module config (small, consistent with the PyTorch forward).
    batch, seq, input_dim = 2, 8, 32
    embed_dim, num_heads, window_size = 32, 4, 4

    key = jax.random.PRNGKey(0)
    kx, kw1, kw2 = jax.random.split(key, 3)

    x = jax.random.normal(kx, (batch, seq, input_dim), dtype=jnp.float32)
    # padding mask: 0 indicates padding; pad the last 2 tokens of batch 1.
    padding_mask = jnp.ones((batch, seq), dtype=jnp.float32)
    padding_mask = padding_mask.at[1, -2:].set(0.0)

    params = {
        "wqkv": xavier_uniform(kw1, (3 * embed_dim, input_dim)),  # [out, in]
        "bqkv": jnp.zeros((3 * embed_dim,), jnp.float32),
        "wo": xavier_uniform(kw2, (embed_dim, embed_dim)),        # [out, in]
        "bo": jnp.zeros((embed_dim,), jnp.float32),
    }

    out = multi_head_attention(x, padding_mask, params,
                               num_heads=num_heads, window_size=window_size)
    out = jax.block_until_ready(out)

    ref = reference(x, padding_mask, params,
                    num_heads=num_heads, window_size=window_size)
    assert out.shape == (batch, seq, embed_dim)
    assert jnp.allclose(out, ref, rtol=1e-5, atol=1e-5), "mismatch vs reference"

    print("KERNEL_OK")
</pallas_src>

<mosaic_0001>
module attributes {stable_mosaic.version = 11 : i64} {
  func.func @mha_kernel(%arg0: memref<16x32xf32, #tpu.memory_space<vmem>>, %arg1: memref<2x8xf32, #tpu.memory_space<vmem>>, %arg2: memref<32x96xf32, #tpu.memory_space<vmem>>, %arg3: memref<1x96xf32, #tpu.memory_space<vmem>>, %arg4: memref<32x32xf32, #tpu.memory_space<vmem>>, %arg5: memref<1x32xf32, #tpu.memory_space<vmem>>, %arg6: memref<16x32xf32, #tpu.memory_space<vmem>>) attributes {dimension_semantics = [], scalar_prefetch = 0 : i64, scratch_operands = 0 : i64, tpu.core_type = #tpu.core_type<tc>} {
    %c0 = arith.constant 0 : index
    %c0_0 = arith.constant 0 : index
    %0 = vector.load %arg0[%c0, %c0_0] : memref<16x32xf32, #tpu.memory_space<vmem>>, vector<16x32xf32>
    %c0_1 = arith.constant 0 : index
    %c0_2 = arith.constant 0 : index
    %1 = vector.load %arg2[%c0_1, %c0_2] : memref<32x96xf32, #tpu.memory_space<vmem>>, vector<32x96xf32>
    %cst = arith.constant dense<0.000000e+00> : vector<16x96xf32>
    %2 = tpu.matmul %0, %1, %cst {dimension_numbers = #tpu.dot_dimension_numbers<[1], [0], [0], [1], [0, 0, 1, 1], [], []>} : vector<16x32xf32>, vector<32x96xf32>, vector<16x96xf32> -> vector<16x96xf32>
    %c0_3 = arith.constant 0 : index
    %c0_4 = arith.constant 0 : index
    %3 = vector.load %arg3[%c0_3, %c0_4] : memref<1x96xf32, #tpu.memory_space<vmem>>, vector<1x96xf32>
    %4 = vector.broadcast %3 : vector<1x96xf32> to vector<16x96xf32>
    %5 = arith.addf %2, %4 : vector<16x96xf32>
    %6 = vector.extract_strided_slice %5 {offsets = [0, 0], sizes = [16, 32], strides = [1, 1]} : vector<16x96xf32> to vector<16x32xf32>
    %7 = vector.extract_strided_slice %5 {offsets = [0, 32], sizes = [16, 32], strides = [1, 1]} : vector<16x96xf32> to vector<16x32xf32>
    %8 = vector.extract_strided_slice %5 {offsets = [0, 64], sizes = [16, 32], strides = [1, 1]} : vector<16x96xf32> to vector<16x32xf32>
    %c0_5 = arith.constant 0 : index
    %c0_6 = arith.constant 0 : index
    %9 = vector.load %arg4[%c0_5, %c0_6] : memref<32x32xf32, #tpu.memory_space<vmem>>, vector<32x32xf32>
    %c0_7 = arith.constant 0 : index
    %c0_8 = arith.constant 0 : index
    %10 = vector.load %arg1[%c0_7, %c0_8] : memref<2x8xf32, #tpu.memory_space<vmem>>, vector<2x8xf32>
    %11 = tpu.iota {dimensions = array<i32: 0>} : vector<8x8xi32>
    %12 = tpu.iota {dimensions = array<i32: 1>} : vector<8x8xi32>
    %13 = arith.subi %11, %12 : vector<8x8xi32>
    %14 = math.absi %13 : vector<8x8xi32>
    %c2_i32 = arith.constant 2 : i32
    %15 = vector.broadcast %c2_i32 : i32 to vector<8x8xi32>
    %16 = arith.cmpi sle, %14, %15 : vector<8x8xi32>
    %17 = vector.extract_strided_slice %6 {offsets = [0, 0], sizes = [8, 32], strides = [1, 1]} : vector<16x32xf32> to vector<8x32xf32>
    %18 = vector.extract_strided_slice %7 {offsets = [0, 0], sizes = [8, 32], strides = [1, 1]} : vector<16x32xf32> to vector<8x32xf32>
    %19 = vector.extract_strided_slice %8 {offsets = [0, 0], sizes = [8, 32], strides = [1, 1]} : vector<16x32xf32> to vector<8x32xf32>
    %20 = vector.extract_strided_slice %10 {offsets = [0, 0], sizes = [1, 8], strides = [1, 1]} : vector<2x8xf32> to vector<1x8xf32>
    %cst_9 = arith.constant 0.000000e+00 : f32
    %21 = vector.broadcast %cst_9 : f32 to vector<1x8xf32>
    %22 = arith.cmpf one, %20, %21 : vector<1x8xf32>
    %23 = vector.broadcast %22 : vector<1x8xi1> to vector<8x8xi1>
    %24 = arith.andi %16, %23 : vector<8x8xi1>
    %cst_10 = arith.constant 0.000000e+00 : f32
    %25 = vector.broadcast %cst_10 : f32 to vector<8x32xf32>
    %26 = vector.extract_strided_slice %17 {offsets = [0, 0], sizes = [8, 8], strides = [1, 1]} : vector<8x32xf32> to vector<8x8xf32>
    %27 = vector.extract_strided_slice %18 {offsets = [0, 0], sizes = [8, 8], strides = [1, 1]} : vector<8x32xf32> to vector<8x8xf32>
    %28 = vector.extract_strided_slice %19 {offsets = [0, 0], sizes = [8, 8], strides = [1, 1]} : vector<8x32xf32> to vector<8x8xf32>
    %cst_11 = arith.constant dense<0.000000e+00> : vector<8x8xf32>
    %29 = tpu.matmul %26, %27, %cst_11 {dimension_numbers = #tpu.dot_dimension_numbers<[1], [1], [0], [0], [0, 0, 1, 0], [], []>} : vector<8x8xf32>, vector<8x8xf32>, vector<8x8xf32> -> vector<8x8xf32>
    %cst_12 = arith.constant -9.000000e+15 : f32
    %30 = vector.broadcast %cst_12 : f32 to vector<8x8xf32>
    %31 = arith.select %24, %29, %30 : vector<8x8xi1>, vector<8x8xf32>
    %cst_13 = arith.constant dense<0xFF800000> : vector<8xf32>
    %32 = vector.multi_reduction <maximumf>, %31, %cst_13 [1] : vector<8x8xf32> to vector<8xf32>
    %33 = vector.shape_cast %32 : vector<8xf32> to vector<8x1xf32>
    %34 = vector.broadcast %33 : vector<8x1xf32> to vector<8x8xf32>
    %35 = arith.subf %31, %34 : vector<8x8xf32>
    %36 = math.exp %35 : vector<8x8xf32>
    %cst_14 = arith.constant dense<0.000000e+00> : vector<8xf32>
    %37 = vector.multi_reduction <add>, %36, %cst_14 [1] : vector<8x8xf32> to vector<8xf32>
    %38 = vector.shape_cast %37 : vector<8xf32> to vector<8x1xf32>
    %39 = tpu.reciprocal %38 : vector<8x1xf32> -> vector<8x1xf32>
    %40 = vector.broadcast %39 : vector<8x1xf32> to vector<8x8xf32>
    %41 = arith.mulf %36, %40 : vector<8x8xf32>
    %cst_15 = arith.constant dense<0.000000e+00> : vector<8x8xf32>
    %42 = tpu.matmul %41, %28, %cst_15 {dimension_numbers = #tpu.dot_dimension_numbers<[1], [0], [0], [1], [0, 0, 1, 1], [], []>} : vector<8x8xf32>, vector<8x8xf32>, vector<8x8xf32> -> vector<8x8xf32>
    %43 = vector.extract_strided_slice %9 {offsets = [0, 0], sizes = [8, 32], strides = [1, 1]} : vector<32x32xf32> to vector<8x32xf32>
    %cst_16 = arith.constant dense<0.000000e+00> : vector<8x32xf32>
    %44 = tpu.matmul %42, %43, %cst_16 {dimension_numbers = #tpu.dot_dimension_numbers<[1], [0], [0], [1], [0, 0, 1, 1], [], []>} : vector<8x8xf32>, vector<8x32xf32>, vector<8x32xf32> -> vector<8x32xf32>
    %45 = arith.addf %25, %44 : vector<8x32xf32>
    %46 = vector.extract_strided_slice %17 {offsets = [0, 8], sizes = [8, 8], strides = [1, 1]} : vector<8x32xf32> to vector<8x8xf32>
    %47 = vector.extract_strided_slice %18 {offsets = [0, 8], sizes = [8, 8], strides = [1, 1]} : vector<8x32xf32> to vector<8x8xf32>
    %48 = vector.extract_strided_slice %19 {offsets = [0, 8], sizes = [8, 8], strides = [1, 1]} : vector<8x32xf32> to vector<8x8xf32>
    %cst_17 = arith.constant dense<0.000000e+00> : vector<8x8xf32>
    %49 = tpu.matmul %46, %47, %cst_17 {dimension_numbers = #tpu.dot_dimension_numbers<[1], [1], [0], [0], [0, 0, 1, 0], [], []>} : vector<8x8xf32>, vector<8x8xf32>, vector<8x8xf32> -> vector<8x8xf32>
    %cst_18 = arith.constant -9.000000e+15 : f32
    %50 = vector.broadcast %cst_18 : f32 to vector<8x8xf32>
    %51 = arith.select %24, %49, %50 : vector<8x8xi1>, vector<8x8xf32>
    %cst_19 = arith.constant dense<0xFF800000> : vector<8xf32>
    %52 = vector.multi_reduction <maximumf>, %51, %cst_19 [1] : vector<8x8xf32> to vector<8xf32>
    %53 = vector.shape_cast %52 : vector<8xf32> to vector<8x1xf32>
    %54 = vector.broadcast %53 : vector<8x1xf32> to vector<8x8xf32>
    %55 = arith.subf %51, %54 : vector<8x8xf32>
    %56 = math.exp %55 : vector<8x8xf32>
    %cst_20 = arith.constant dense<0.000000e+00> : vector<8xf32>
    %57 = vector.multi_reduction <add>, %56, %cst_20 [1] : vector<8x8xf32> to vector<8xf32>
    %58 = vector.shape_cast %57 : vector<8xf32> to vector<8x1xf32>
    %59 = tpu.reciprocal %58 : vector<8x1xf32> -> vector<8x1xf32>
    %60 = vector.broadcast %59 : vector<8x1xf32> to vector<8x8xf32>
    %61 = arith.mulf %56, %60 : vector<8x8xf32>
    %cst_21 = arith.constant dense<0.000000e+00> : vector<8x8xf32>
    %62 = tpu.matmul %61, %48, %cst_21 {dimension_numbers = #tpu.dot_dimension_numbers<[1], [0], [0], [1], [0, 0, 1, 1], [], []>} : vector<8x8xf32>, vector<8x8xf32>, vector<8x8xf32> -> vector<8x8xf32>
    %63 = vector.extract_strided_slice %9 {offsets = [8, 0], sizes = [8, 32], strides = [1, 1]} : vector<32x32xf32> to vector<8x32xf32>
    %cst_22 = arith.constant dense<0.000000e+00> : vector<8x32xf32>
    %64 = tpu.matmul %62, %63, %cst_22 {dimension_numbers = #tpu.dot_dimension_numbers<[1], [0], [0], [1], [0, 0, 1, 1], [], []>} : vector<8x8xf32>, vector<8x32xf32>, vector<8x32xf32> -> vector<8x32xf32>
    %65 = arith.addf %45, %64 : vector<8x32xf32>
    %66 = vector.extract_strided_slice %17 {offsets = [0, 16], sizes = [8, 8], strides = [1, 1]} : vector<8x32xf32> to vector<8x8xf32>
    %67 = vector.extract_strided_slice %18 {offsets = [0, 16], sizes = [8, 8], strides = [1, 1]} : vector<8x32xf32> to vector<8x8xf32>
    %68 = vector.extract_strided_slice %19 {offsets = [0, 16], sizes = [8, 8], strides = [1, 1]} : vector<8x32xf32> to vector<8x8xf32>
    %cst_23 = arith.constant dense<0.000000e+00> : vector<8x8xf32>
    %69 = tpu.matmul %66, %67, %cst_23 {dimension_numbers = #tpu.dot_dimension_numbers<[1], [1], [0], [0], [0, 0, 1, 0], [], []>} : vector<8x8xf32>, vector<8x8xf32>, vector<8x8xf32> -> vector<8x8xf32>
    %cst_24 = arith.constant -9.000000e+15 : f32
    %70 = vector.broadcast %cst_24 : f32 to vector<8x8xf32>
    %71 = arith.select %24, %69, %70 : vector<8x8xi1>, vector<8x8xf32>
    %cst_25 = arith.constant dense<0xFF800000> : vector<8xf32>
    %72 = vector.multi_reduction <maximumf>, %71, %cst_25 [1] : vector<8x8xf32> to vector<8xf32>
    %73 = vector.shape_cast %72 : vector<8xf32> to vector<8x1xf32>
    %74 = vector.broadcast %73 : vector<8x1xf32> to vector<8x8xf32>
    %75 = arith.subf %71, %74 : vector<8x8xf32>
    %76 = math.exp %75 : vector<8x8xf32>
    %cst_26 = arith.constant dense<0.000000e+00> : vector<8xf32>
    %77 = vector.multi_reduction <add>, %76, %cst_26 [1] : vector<8x8xf32> to vector<8xf32>
    %78 = vector.shape_cast %77 : vector<8xf32> to vector<8x1xf32>
    %79 = tpu.reciprocal %78 : vector<8x1xf32> -> vector<8x1xf32>
    %80 = vector.broadcast %79 : vector<8x1xf32> to vector<8x8xf32>
    %81 = arith.mulf %76, %80 : vector<8x8xf32>
    %cst_27 = arith.constant dense<0.000000e+00> : vector<8x8xf32>
    %82 = tpu.matmul %81, %68, %cst_27 {dimension_numbers = #tpu.dot_dimension_numbers<[1], [0], [0], [1], [0, 0, 1, 1], [], []>} : vector<8x8xf32>, vector<8x8xf32>, vector<8x8xf32> -> vector<8x8xf32>
    %83 = vector.extract_strided_slice %9 {offsets = [16, 0], sizes = [8, 32], strides = [1, 1]} : vector<32x32xf32> to vector<8x32xf32>
    %cst_28 = arith.constant dense<0.000000e+00> : vector<8x32xf32>
    %84 = tpu.matmul %82, %83, %cst_28 {dimension_numbers = #tpu.dot_dimension_numbers<[1], [0], [0], [1], [0, 0, 1, 1], [], []>} : vector<8x8xf32>, vector<8x32xf32>, vector<8x32xf32> -> vector<8x32xf32>
    %85 = arith.addf %65, %84 : vector<8x32xf32>
    %86 = vector.extract_strided_slice %17 {offsets = [0, 24], sizes = [8, 8], strides = [1, 1]} : vector<8x32xf32> to vector<8x8xf32>
    %87 = vector.extract_strided_slice %18 {offsets = [0, 24], sizes = [8, 8], strides = [1, 1]} : vector<8x32xf32> to vector<8x8xf32>
    %88 = vector.extract_strided_slice %19 {offsets = [0, 24], sizes = [8, 8], strides = [1, 1]} : vector<8x32xf32> to vector<8x8xf32>
    %cst_29 = arith.constant dense<0.000000e+00> : vector<8x8xf32>
    %89 = tpu.matmul %86, %87, %cst_29 {dimension_numbers = #tpu.dot_dimension_numbers<[1], [1], [0], [0], [0, 0, 1, 0], [], []>} : vector<8x8xf32>, vector<8x8xf32>, vector<8x8xf32> -> vector<8x8xf32>
    %cst_30 = arith.constant -9.000000e+15 : f32
    %90 = vector.broadcast %cst_30 : f32 to vector<8x8xf32>
    %91 = arith.select %24, %89, %90 : vector<8x8xi1>, vector<8x8xf32>
    %cst_31 = arith.constant dense<0xFF800000> : vector<8xf32>
    %92 = vector.multi_reduction <maximumf>, %91, %cst_31 [1] : vector<8x8xf32> to vector<8xf32>
    %93 = vector.shape_cast %92 : vector<8xf32> to vector<8x1xf32>
    %94 = vector.broadcast %93 : vector<8x1xf32> to vector<8x8xf32>
    %95 = arith.subf %91, %94 : vector<8x8xf32>
    %96 = math.exp %95 : vector<8x8xf32>
    %cst_32 = arith.constant dense<0.000000e+00> : vector<8xf32>
    %97 = vector.multi_reduction <add>, %96, %cst_32 [1] : vector<8x8xf32> to vector<8xf32>
    %98 = vector.shape_cast %97 : vector<8xf32> to vector<8x1xf32>
    %99 = tpu.reciprocal %98 : vector<8x1xf32> -> vector<8x1xf32>
    %100 = vector.broadcast %99 : vector<8x1xf32> to vector<8x8xf32>
    %101 = arith.mulf %96, %100 : vector<8x8xf32>
    %cst_33 = arith.constant dense<0.000000e+00> : vector<8x8xf32>
    %102 = tpu.matmul %101, %88, %cst_33 {dimension_numbers = #tpu.dot_dimension_numbers<[1], [0], [0], [1], [0, 0, 1, 1], [], []>} : vector<8x8xf32>, vector<8x8xf32>, vector<8x8xf32> -> vector<8x8xf32>
    %103 = vector.extract_strided_slice %9 {offsets = [24, 0], sizes = [8, 32], strides = [1, 1]} : vector<32x32xf32> to vector<8x32xf32>
    %cst_34 = arith.constant dense<0.000000e+00> : vector<8x32xf32>
    %104 = tpu.matmul %102, %103, %cst_34 {dimension_numbers = #tpu.dot_dimension_numbers<[1], [0], [0], [1], [0, 0, 1, 1], [], []>} : vector<8x8xf32>, vector<8x32xf32>, vector<8x32xf32> -> vector<8x32xf32>
    %105 = arith.addf %85, %104 : vector<8x32xf32>
    %106 = vector.extract_strided_slice %6 {offsets = [8, 0], sizes = [8, 32], strides = [1, 1]} : vector<16x32xf32> to vector<8x32xf32>
    %107 = vector.extract_strided_slice %7 {offsets = [8, 0], sizes = [8, 32], strides = [1, 1]} : vector<16x32xf32> to vector<8x32xf32>
    %108 = vector.extract_strided_slice %8 {offsets = [8, 0], sizes = [8, 32], strides = [1, 1]} : vector<16x32xf32> to vector<8x32xf32>
    %109 = vector.extract_strided_slice %10 {offsets = [1, 0], sizes = [1, 8], strides = [1, 1]} : vector<2x8xf32> to vector<1x8xf32>
    %cst_35 = arith.constant 0.000000e+00 : f32
    %110 = vector.broadcast %cst_35 : f32 to vector<1x8xf32>
    %111 = arith.cmpf one, %109, %110 : vector<1x8xf32>
    %112 = vector.broadcast %111 : vector<1x8xi1> to vector<8x8xi1>
    %113 = arith.andi %16, %112 : vector<8x8xi1>
    %cst_36 = arith.constant 0.000000e+00 : f32
    %114 = vector.broadcast %cst_36 : f32 to vector<8x32xf32>
    %115 = vector.extract_strided_slice %106 {offsets = [0, 0], sizes = [8, 8], strides = [1, 1]} : vector<8x32xf32> to vector<8x8xf32>
    %116 = vector.extract_strided_slice %107 {offsets = [0, 0], sizes = [8, 8], strides = [1, 1]} : vector<8x32xf32> to vector<8x8xf32>
    %117 = vector.extract_strided_slice %108 {offsets = [0, 0], sizes = [8, 8], strides = [1, 1]} : vector<8x32xf32> to vector<8x8xf32>
    %cst_37 = arith.constant dense<0.000000e+00> : vector<8x8xf32>
    %118 = tpu.matmul %115, %116, %cst_37 {dimension_numbers = #tpu.dot_dimension_numbers<[1], [1], [0], [0], [0, 0, 1, 0], [], []>} : vector<8x8xf32>, vector<8x8xf32>, vector<8x8xf32> -> vector<8x8xf32>
    %cst_38 = arith.constant -9.000000e+15 : f32
    %119 = vector.broadcast %cst_38 : f32 to vector<8x8xf32>
    %120 = arith.select %113, %118, %119 : vector<8x8xi1>, vector<8x8xf32>
    %cst_39 = arith.constant dense<0xFF800000> : vector<8xf32>
    %121 = vector.multi_reduction <maximumf>, %120, %cst_39 [1] : vector<8x8xf32> to vector<8xf32>
    %122 = vector.shape_cast %121 : vector<8xf32> to vector<8x1xf32>
    %123 = vector.broadcast %122 : vector<8x1xf32> to vector<8x8xf32>
    %124 = arith.subf %120, %123 : vector<8x8xf32>
    %125 = math.exp %124 : vector<8x8xf32>
    %cst_40 = arith.constant dense<0.000000e+00> : vector<8xf32>
    %126 = vector.multi_reduction <add>, %125, %cst_40 [1] : vector<8x8xf32> to vector<8xf32>
    %127 = vector.shape_cast %126 : vector<8xf32> to vector<8x1xf32>
    %128 = tpu.reciprocal %127 : vector<8x1xf32> -> vector<8x1xf32>
    %129 = vector.broadcast %128 : vector<8x1xf32> to vector<8x8xf32>
    %130 = arith.mulf %125, %129 : vector<8x8xf32>
    %cst_41 = arith.constant dense<0.000000e+00> : vector<8x8xf32>
    %131 = tpu.matmul %130, %117, %cst_41 {dimension_numbers = #tpu.dot_dimension_numbers<[1], [0], [0], [1], [0, 0, 1, 1], [], []>} : vector<8x8xf32>, vector<8x8xf32>, vector<8x8xf32> -> vector<8x8xf32>
    %132 = vector.extract_strided_slice %9 {offsets = [0, 0], sizes = [8, 32], strides = [1, 1]} : vector<32x32xf32> to vector<8x32xf32>
    %cst_42 = arith.constant dense<0.000000e+00> : vector<8x32xf32>
    %133 = tpu.matmul %131, %132, %cst_42 {dimension_numbers = #tpu.dot_dimension_numbers<[1], [0], [0], [1], [0, 0, 1, 1], [], []>} : vector<8x8xf32>, vector<8x32xf32>, vector<8x32xf32> -> vector<8x32xf32>
    %134 = arith.addf %114, %133 : vector<8x32xf32>
    %135 = vector.extract_strided_slice %106 {offsets = [0, 8], sizes = [8, 8], strides = [1, 1]} : vector<8x32xf32> to vector<8x8xf32>
    %136 = vector.extract_strided_slice %107 {offsets = [0, 8], sizes = [8, 8], strides = [1, 1]} : vector<8x32xf32> to vector<8x8xf32>
    %137 = vector.extract_strided_slice %108 {offsets = [0, 8], sizes = [8, 8], strides = [1, 1]} : vector<8x32xf32> to vector<8x8xf32>
    %cst_43 = arith.constant dense<0.000000e+00> : vector<8x8xf32>
    %138 = tpu.matmul %135, %136, %cst_43 {dimension_numbers = #tpu.dot_dimension_numbers<[1], [1], [0], [0], [0, 0, 1, 0], [], []>} : vector<8x8xf32>, vector<8x8xf32>, vector<8x8xf32> -> vector<8x8xf32>
    %cst_44 = arith.constant -9.000000e+15 : f32
    %139 = vector.broadcast %cst_44 : f32 to vector<8x8xf32>
    %140 = arith.select %113, %138, %139 : vector<8x8xi1>, vector<8x8xf32>
    %cst_45 = arith.constant dense<0xFF800000> : vector<8xf32>
    %141 = vector.multi_reduction <maximumf>, %140, %cst_45 [1] : vector<8x8xf32> to vector<8xf32>
    %142 = vector.shape_cast %141 : vector<8xf32> to vector<8x1xf32>
    %143 = vector.broadcast %142 : vector<8x1xf32> to vector<8x8xf32>
    %144 = arith.subf %140, %143 : vector<8x8xf32>
    %145 = math.exp %144 : vector<8x8xf32>
    %cst_46 = arith.constant dense<0.000000e+00> : vector<8xf32>
    %146 = vector.multi_reduction <add>, %145, %cst_46 [1] : vector<8x8xf32> to vector<8xf32>
    %147 = vector.shape_cast %146 : vector<8xf32> to vector<8x1xf32>
    %148 = tpu.reciprocal %147 : vector<8x1xf32> -> vector<8x1xf32>
    %149 = vector.broadcast %148 : vector<8x1xf32> to vector<8x8xf32>
    %150 = arith.mulf %145, %149 : vector<8x8xf32>
    %cst_47 = arith.constant dense<0.000000e+00> : vector<8x8xf32>
    %151 = tpu.matmul %150, %137, %cst_47 {dimension_numbers = #tpu.dot_dimension_numbers<[1], [0], [0], [1], [0, 0, 1, 1], [], []>} : vector<8x8xf32>, vector<8x8xf32>, vector<8x8xf32> -> vector<8x8xf32>
    %152 = vector.extract_strided_slice %9 {offsets = [8, 0], sizes = [8, 32], strides = [1, 1]} : vector<32x32xf32> to vector<8x32xf32>
    %cst_48 = arith.constant dense<0.000000e+00> : vector<8x32xf32>
    %153 = tpu.matmul %151, %152, %cst_48 {dimension_numbers = #tpu.dot_dimension_numbers<[1], [0], [0], [1], [0, 0, 1, 1], [], []>} : vector<8x8xf32>, vector<8x32xf32>, vector<8x32xf32> -> vector<8x32xf32>
    %154 = arith.addf %134, %153 : vector<8x32xf32>
    %155 = vector.extract_strided_slice %106 {offsets = [0, 16], sizes = [8, 8], strides = [1, 1]} : vector<8x32xf32> to vector<8x8xf32>
    %156 = vector.extract_strided_slice %107 {offsets = [0, 16], sizes = [8, 8], strides = [1, 1]} : vector<8x32xf32> to vector<8x8xf32>
    %157 = vector.extract_strided_slice %108 {offsets = [0, 16], sizes = [8, 8], strides = [1, 1]} : vector<8x32xf32> to vector<8x8xf32>
    %cst_49 = arith.constant dense<0.000000e+00> : vector<8x8xf32>
    %158 = tpu.matmul %155, %156, %cst_49 {dimension_numbers = #tpu.dot_dimension_numbers<[1], [1], [0], [0], [0, 0, 1, 0], [], []>} : vector<8x8xf32>, vector<8x8xf32>, vector<8x8xf32> -> vector<8x8xf32>
    %cst_50 = arith.constant -9.000000e+15 : f32
    %159 = vector.broadcast %cst_50 : f32 to vector<8x8xf32>
    %160 = arith.select %113, %158, %159 : vector<8x8xi1>, vector<8x8xf32>
    %cst_51 = arith.constant dense<0xFF800000> : vector<8xf32>
    %161 = vector.multi_reduction <maximumf>, %160, %cst_51 [1] : vector<8x8xf32> to vector<8xf32>
    %162 = vector.shape_cast %161 : vector<8xf32> to vector<8x1xf32>
    %163 = vector.broadcast %162 : vector<8x1xf32> to vector<8x8xf32>
    %164 = arith.subf %160, %163 : vector<8x8xf32>
    %165 = math.exp %164 : vector<8x8xf32>
    %cst_52 = arith.constant dense<0.000000e+00> : vector<8xf32>
    %166 = vector.multi_reduction <add>, %165, %cst_52 [1] : vector<8x8xf32> to vector<8xf32>
    %167 = vector.shape_cast %166 : vector<8xf32> to vector<8x1xf32>
    %168 = tpu.reciprocal %167 : vector<8x1xf32> -> vector<8x1xf32>
    %169 = vector.broadcast %168 : vector<8x1xf32> to vector<8x8xf32>
    %170 = arith.mulf %165, %169 : vector<8x8xf32>
    %cst_53 = arith.constant dense<0.000000e+00> : vector<8x8xf32>
    %171 = tpu.matmul %170, %157, %cst_53 {dimension_numbers = #tpu.dot_dimension_numbers<[1], [0], [0], [1], [0, 0, 1, 1], [], []>} : vector<8x8xf32>, vector<8x8xf32>, vector<8x8xf32> -> vector<8x8xf32>
    %172 = vector.extract_strided_slice %9 {offsets = [16, 0], sizes = [8, 32], strides = [1, 1]} : vector<32x32xf32> to vector<8x32xf32>
    %cst_54 = arith.constant dense<0.000000e+00> : vector<8x32xf32>
    %173 = tpu.matmul %171, %172, %cst_54 {dimension_numbers = #tpu.dot_dimension_numbers<[1], [0], [0], [1], [0, 0, 1, 1], [], []>} : vector<8x8xf32>, vector<8x32xf32>, vector<8x32xf32> -> vector<8x32xf32>
    %174 = arith.addf %154, %173 : vector<8x32xf32>
    %175 = vector.extract_strided_slice %106 {offsets = [0, 24], sizes = [8, 8], strides = [1, 1]} : vector<8x32xf32> to vector<8x8xf32>
    %176 = vector.extract_strided_slice %107 {offsets = [0, 24], sizes = [8, 8], strides = [1, 1]} : vector<8x32xf32> to vector<8x8xf32>
    %177 = vector.extract_strided_slice %108 {offsets = [0, 24], sizes = [8, 8], strides = [1, 1]} : vector<8x32xf32> to vector<8x8xf32>
    %cst_55 = arith.constant dense<0.000000e+00> : vector<8x8xf32>
    %178 = tpu.matmul %175, %176, %cst_55 {dimension_numbers = #tpu.dot_dimension_numbers<[1], [1], [0], [0], [0, 0, 1, 0], [], []>} : vector<8x8xf32>, vector<8x8xf32>, vector<8x8xf32> -> vector<8x8xf32>
    %cst_56 = arith.constant -9.000000e+15 : f32
    %179 = vector.broadcast %cst_56 : f32 to vector<8x8xf32>
    %180 = arith.select %113, %178, %179 : vector<8x8xi1>, vector<8x8xf32>
    %cst_57 = arith.constant dense<0xFF800000> : vector<8xf32>
    %181 = vector.multi_reduction <maximumf>, %180, %cst_57 [1] : vector<8x8xf32> to vector<8xf32>
    %182 = vector.shape_cast %181 : vector<8xf32> to vector<8x1xf32>
    %183 = vector.broadcast %182 : vector<8x1xf32> to vector<8x8xf32>
    %184 = arith.subf %180, %183 : vector<8x8xf32>
    %185 = math.exp %184 : vector<8x8xf32>
    %cst_58 = arith.constant dense<0.000000e+00> : vector<8xf32>
    %186 = vector.multi_reduction <add>, %185, %cst_58 [1] : vector<8x8xf32> to vector<8xf32>
    %187 = vector.shape_cast %186 : vector<8xf32> to vector<8x1xf32>
    %188 = tpu.reciprocal %187 : vector<8x1xf32> -> vector<8x1xf32>
    %189 = vector.broadcast %188 : vector<8x1xf32> to vector<8x8xf32>
    %190 = arith.mulf %185, %189 : vector<8x8xf32>
    %cst_59 = arith.constant dense<0.000000e+00> : vector<8x8xf32>
    %191 = tpu.matmul %190, %177, %cst_59 {dimension_numbers = #tpu.dot_dimension_numbers<[1], [0], [0], [1], [0, 0, 1, 1], [], []>} : vector<8x8xf32>, vector<8x8xf32>, vector<8x8xf32> -> vector<8x8xf32>
    %192 = vector.extract_strided_slice %9 {offsets = [24, 0], sizes = [8, 32], strides = [1, 1]} : vector<32x32xf32> to vector<8x32xf32>
    %cst_60 = arith.constant dense<0.000000e+00> : vector<8x32xf32>
    %193 = tpu.matmul %191, %192, %cst_60 {dimension_numbers = #tpu.dot_dimension_numbers<[1], [0], [0], [1], [0, 0, 1, 1], [], []>} : vector<8x8xf32>, vector<8x32xf32>, vector<8x32xf32> -> vector<8x32xf32>
    %194 = arith.addf %174, %193 : vector<8x32xf32>
    %195 = tpu.concatenate %105, %194 in 0 : vector<8x32xf32>, vector<8x32xf32> -> vector<16x32xf32>
    %c0_61 = arith.constant 0 : index
    %c0_62 = arith.constant 0 : index
    %196 = vector.load %arg5[%c0_61, %c0_62] : memref<1x32xf32, #tpu.memory_space<vmem>>, vector<1x32xf32>
    %197 = vector.broadcast %196 : vector<1x32xf32> to vector<16x32xf32>
    %198 = arith.addf %195, %197 : vector<16x32xf32>
    %c0_63 = arith.constant 0 : index
    %c0_64 = arith.constant 0 : index
    %199 = vector.load %arg6[%c0_63, %c0_64] : memref<16x32xf32, #tpu.memory_space<vmem>>, vector<16x32xf32>
    tpu.vector_store %arg6[%c0_63, %c0_64], %198 {strides = array<i32>} : memref<16x32xf32, #tpu.memory_space<vmem>>, vector<16x32xf32>,
    return
  }
}

</mosaic_0001>

<llo_original>
// kernel: tpu_custom_call.1
$region0: #{tpu_custom_call.1}
  #allocation0 [shape = 'u32[]', space=smem, size = 0x4, offset = 0x4, fixed_abs, tag = 'smem constant byte address 0x4 - core index']
  #allocation1 [shape = 'u32[144,128]{1,0:T(1,128)}', space=vmem, size = 0x12000, scoped, tag = 'internal scratch']
  %s0 = inlined_call_operand.hbm [shape: f32[16,32], index: 0, kind: input, shape index: {}]
  %s1 = inlined_call_operand.vmem [shape: f32[2,8], index: 1, kind: input, shape index: {}]
  %s2 = inlined_call_operand.hbm [shape: f32[32,96], index: 2, kind: input, shape index: {}]
  %s3 = inlined_call_operand.vmem [shape: f32[1,96], index: 3, kind: input, shape index: {}]
  %s4 = inlined_call_operand.hbm [shape: f32[32,32], index: 4, kind: input, shape index: {}]
  %s5 = inlined_call_operand.vmem [shape: f32[1,32], index: 5, kind: input, shape index: {}]
  %s6 = inlined_call_operand.hbm [shape: f32[16,32], index: 6, kind: output, shape index: {}]
  %s7 = sld [smem:[#allocation0]]
  $region46: #{tpu_custom_call.1} parent=0
    _
  %s9 = ssub.s32 1, %s7
  %s10 = scalar_select 0, %s9, %s7
  $region1: #{tpu_custom_call.1} parent=0
    #allocation2 [shape = 'u8[8192]{0}', space=vmem, size = 0x2000, scoped, tag = 'input window, operand 0, single buffered']
    #allocation3 [shape = 's32[1]{0}', space=sflag, size = 0x4, scoped, tag = 'scoped memory for tpu_custom_call.1']
    #allocation4 [shape = 's32[1]{0}', space=sflag, size = 0x4, scoped, tag = 'scoped memory for tpu_custom_call.1']
    #allocation5 [shape = 'u8[16384]{0}', space=vmem, size = 0x4000, scoped, tag = 'input window, operand 2, single buffered']
    #allocation6 [shape = 's32[1]{0}', space=sflag, size = 0x4, scoped, tag = 'scoped memory for tpu_custom_call.1']
    #allocation7 [shape = 'u8[16384]{0}', space=vmem, size = 0x4000, scoped, tag = 'input window, operand 4, single buffered']
    #allocation8 [shape = 'u8[8192]{0}', space=vmem, size = 0x2000, scoped, tag = 'output window, operand 0, single buffered']
    %11 = vsyncpa [#allocation3], 0
    %12 = vsyncpa [#allocation6], 0
    %13 = vsyncpa [#allocation4], 0
    // Predicated region
    $region2: #{tpu_custom_call.1} parent=1 // pred_check
      _
    $region3: #{tpu_custom_call.1} parent=1 // pred_check_branch
      %15 = sbr.rel (0) target = $region5
    $region4: #{tpu_custom_call.1} parent=1 // pred_region
      %s17 = ssub.s32 256, 256
      %18 = vsyncadd [#allocation3], %s17
      %s19 = sshll.u32 [#allocation2], 4
      %s20 = int_to_ptr.vmem [resolvable:$true] %s19
      %25 = dma.hbm_to_vmem [thread:$0]  %s0, 256, %s20, [#allocation3], 128, 128, 8
    $region5: #{tpu_custom_call.1} parent=1 // pred_fallthru
      _
    // Predicated region
    $region6: #{tpu_custom_call.1} parent=1 // pred_check
      _
    $region7: #{tpu_custom_call.1} parent=1 // pred_check_branch
      %27 = sbr.rel (0) target = $region9
    $region8: #{tpu_custom_call.1} parent=1 // pred_region
      _
    $region9: #{tpu_custom_call.1} parent=1 // pred_fallthru
      _
    // Predicated region
    $region10: #{tpu_custom_call.1} parent=1 // pred_check
      _
    $region11: #{tpu_custom_call.1} parent=1 // pred_check_branch
      %29 = sbr.rel (0) target = $region13
    $region12: #{tpu_custom_call.1} parent=1 // pred_region
      %s31 = ssub.s32 512, 512
      %32 = vsyncadd [#allocation6], %s31
      %s33 = sshll.u32 [#allocation5], 4
      %s34 = int_to_ptr.vmem [resolvable:$true] %s33
      %39 = dma.hbm_to_vmem [thread:$0]  %s2, 512, %s34, [#allocation6], 128, 128, 8
    $region13: #{tpu_custom_call.1} parent=1 // pred_fallthru
      _
    // Predicated region
    $region14: #{tpu_custom_call.1} parent=1 // pred_check
      _
    $region15: #{tpu_custom_call.1} parent=1 // pred_check_branch
      %41 = sbr.rel (0) target = $region17
    $region16: #{tpu_custom_call.1} parent=1 // pred_region
      _
    $region17: #{tpu_custom_call.1} parent=1 // pred_fallthru
      _
    // Predicated region
    $region18: #{tpu_custom_call.1} parent=1 // pred_check
      _
    $region19: #{tpu_custom_call.1} parent=1 // pred_check_branch
      %43 = sbr.rel (0) target = $region21
    $region20: #{tpu_custom_call.1} parent=1 // pred_region
      %s45 = ssub.s32 512, 512
      %46 = vsyncadd [#allocation6], %s45
      %s47 = sshll.u32 [#allocation7], 4
      %s48 = int_to_ptr.vmem [resolvable:$true] %s47
      %53 = dma.hbm_to_vmem [thread:$0]  %s4, 512, %s48, [#allocation6], 128, 128, 8
    $region21: #{tpu_custom_call.1} parent=1 // pred_fallthru
      _
    // Predicated region
    $region22: #{tpu_custom_call.1} parent=1 // pred_check
      _
    $region23: #{tpu_custom_call.1} parent=1 // pred_check_branch
      %55 = sbr.rel (0) target = $region25
    $region24: #{tpu_custom_call.1} parent=1 // pred_region
      _
    $region25: #{tpu_custom_call.1} parent=1 // pred_fallthru
      _
    // Predicated region
    $region26: #{tpu_custom_call.1} parent=1 // pred_check
      _
    $region27: #{tpu_custom_call.1} parent=1 // pred_check_branch
      %57 = sbr.rel (0) target = $region29
    $region28: #{tpu_custom_call.1} parent=1 // pred_region
      %58 = dma.done [#allocation3], 256
    $region29: #{tpu_custom_call.1} parent=1 // pred_fallthru
      _
    // Predicated region
    $region30: #{tpu_custom_call.1} parent=1 // pred_check
      _
    $region31: #{tpu_custom_call.1} parent=1 // pred_check_branch
      %60 = sbr.rel (0) target = $region33
    $region32: #{tpu_custom_call.1} parent=1 // pred_region
      %61 = dma.done [#allocation6], 512
    $region33: #{tpu_custom_call.1} parent=1 // pred_fallthru
      _
    // Predicated region
    $region34: #{tpu_custom_call.1} parent=1 // pred_check
      _
    $region35: #{tpu_custom_call.1} parent=1 // pred_check_branch
      %63 = sbr.rel (0) target = $region37
    $region36: #{tpu_custom_call.1} parent=1 // pred_region
      %64 = dma.done [#allocation6], 512
    $region37: #{tpu_custom_call.1} parent=1 // pred_fallthru
      _
    %v65 = vld [vmem:[#allocation2] sm:$0xff]
    %v66 = vld [vmem:[#allocation2 + $0x8] sm:$0xff]
    %v67 = vld [vmem:[#allocation5] sm:$0xff]
    %v68 = vld [vmem:[#allocation5 + $0x8] sm:$0xff]
    %v69 = vld [vmem:[#allocation5 + $0x10] sm:$0xff]
    %v70 = vld [vmem:[#allocation5 + $0x18] sm:$0xff]
    %v71 = vld [vmem:[%s3] sm:$0x1]
    %v73 = vlaneseq
    %v74 = vshrl.u32 %v73, 7
    %v75 = vsub.s32 0, %v74
    %v76 = vrot.slane %v71, %v75
    %vm78 = vcmask 261120
    %v80 = vsel %vm78, %v65, 0
    %v83 = vsel %vm78, %v66, 0
    %85 = vmatprep.subr.mxu0 0.0
    %86 = vmatpush1.msra.mxu0 %v67
    %87 = vmatprep.subr.mxu0 0.0
    %88 = vmatpush1.msra.mxu0 %v68
    %89 = vmatprep.subr.mxu0 0.0
    %90 = vmatpush1.msra.mxu0 %v69
    %91 = vmatprep.subr.mxu0 0.0
    %92 = vmatpush1.msra.mxu0 %v70
    %93 = vmatprep.subr.mxu0 0.0
    %94 = vmatpush1.msra.mxu0 0.0
    %95 = vmatprep.subr.mxu0 0.0
    %96 = vmatpush1.msra.mxu0 0.0
    %97 = vmatprep.subr.mxu0 0.0
    %98 = vmatpush1.msra.mxu0 0.0
    %99 = vmatprep.subr.mxu0 0.0
    %100 = vmatpush1.msra.mxu0 0.0
    %101 = vmatprep.subr.mxu0 0.0
    %102 = vmatpush1.msra.mxu0 0.0
    %103 = vmatprep.subr.mxu0 0.0
    %104 = vmatpush1.msra.mxu0 0.0
    %105 = vmatprep.subr.mxu0 0.0
    %106 = vmatpush1.msra.mxu0 0.0
    %107 = vmatprep.subr.mxu0 0.0
    %108 = vmatpush1.msra.mxu0 0.0
    %109 = vmatprep.subr.mxu0 0.0
    %110 = vmatpush1.msra.mxu0 0.0
    %111 = vmatprep.subr.mxu0 0.0
    %112 = vmatpush1.msra.mxu0 0.0
    %113 = vmatprep.subr.mxu0 0.0
    %114 = vmatpush1.msra.mxu0 0.0
    %115 = vmatprep.subr.mxu0 0.0
    %116 = vmatpush1.msra.mxu0 0.0
    %117 = vmatprep.subr.mxu0 0.0
    %118 = vmatpush1.msra.mxu0 0.0
    %119 = vmatprep.subr.mxu0 0.0
    %120 = vmatpush1.msra.mxu0 0.0
    %121 = vmatprep.subr.mxu0 0.0
    %122 = vmatpush1.msra.mxu0 0.0
    %123 = vmatprep.subr.mxu0 0.0
    %124 = vmatpush1.msra.mxu0 0.0
    %125 = vmatprep.subr.mxu0 0.0
    %126 = vmatpush1.msra.mxu0 0.0
    %127 = vmatprep.subr.mxu0 0.0
    %128 = vmatpush1.msra.mxu0 0.0
    %129 = vmatprep.subr.mxu0 0.0
    %130 = vmatpush1.msra.mxu0 0.0
    %131 = vmatprep.subr.mxu0 0.0
    %132 = vmatpush1.msra.mxu0 0.0
    %133 = vmatprep.subr.mxu0 0.0
    %134 = vmatpush1.msra.mxu0 0.0
    %135 = vmatprep.subr.mxu0 0.0
    %136 = vmatpush1.msra.mxu0 0.0
    %137 = vmatprep.subr.mxu0 0.0
    %138 = vmatpush1.msra.mxu0 0.0
    %139 = vmatprep.subr.mxu0 0.0
    %140 = vmatpush1.msra.mxu0 0.0
    %141 = vmatprep.subr.mxu0 0.0
    %142 = vmatpush1.msra.mxu0 0.0
    %143 = vmatprep.subr.mxu0 0.0
    %144 = vmatpush1.msra.mxu0 0.0
    %145 = vmatprep.subr.mxu0 0.0
    %146 = vmatpush1.msra.mxu0 0.0
    %147 = vmatprep.subr.mxu0 0.0
    %148 = vmatpush1.msra.mxu0 0.0
    %149 = vmatprep.mubr.f32.mxu0 0.0
    %150 = vmatmul.mubr.f32.gmra.mrb[0].mxu0 %v80
    %v151 = vpop.f32.mrb[0].mxu0
    %v152 = vadd.f32 %v76, %v151
    %v153 = vpop.f32.mrb[0].mxu0
    %154 = vmatprep.mubr.f32.mxu0 0.0
    %155 = vmatmul.mubr.f32.gmra.mrb[0].mxu0 %v83
    %v156 = vpop.f32.mrb[0].mxu0
    %v157 = vadd.f32 %v76, %v156
    %v158 = vpop.f32.mrb[0].mxu0
    %159 = vdwg.mxu0
    %v160 = vld [vmem:[#allocation7] sm:$0xff]
    %v161 = vld [vmem:[#allocation7 + $0x8] sm:$0xff]
    %v162 = vld [vmem:[#allocation7 + $0x10] sm:$0xff]
    %v163 = vld [vmem:[#allocation7 + $0x18] sm:$0xff]
    %v164 = vld [vmem:[%s1] sm:$0x3]
    %v165 = vlaneseq
    %v166 = vshrl.u32 %v165, 7
    %v167 = vlaneseq
    %v168 = vand.u32 %v167, 127
    %v169 = vsub.s32 %v166, %v168
    %vm170 = vcmp.lt.s32.totalorder %v169, 0
    %v171 = vsub.s32 0, %v169
    %v172 = vsel %vm170, %v171, %v169
    %vm173 = vcmp.le.s32.totalorder %v172, 2
    %vm174 = vcmp.ne.f32.partialorder %v164, 0.0
    %v175 = vsel %vm174, 1, 0
    %v176 = vlaneseq
    %v177 = vshrl.u32 %v176, 7
    %v178 = vsub.s32 0, %v177
    %v179 = vrot.slane %v175, %v178
    %vm180 = vcmp.eq.s32.totalorder %v179, 1
    %vm181 = vmand %vm173, %vm180
    %183 = vrot.lane.b32.xlu0 %v152, 96
    %v184 = vpop.permute.xlu0 %183
    %vm185 = vcmask 64512
    %v186 = vsel %vm185, %v152, 0
    %v188 = vsel %vm185, %v184, 0
    %190 = vmatprep.subr.mxu0 0.0
    %191 = vmatpush1.xpose.msra.mxu0 %v188
    %192 = vmatprep.subr.mxu0 0.0
    %193 = vmatpush1.xpose.msra.mxu0 0.0
    %194 = vmatprep.subr.mxu0 0.0
    %195 = vmatpush1.xpose.msra.mxu0 0.0
    %196 = vmatprep.subr.mxu0 0.0
    %197 = vmatpush1.xpose.msra.mxu0 0.0
    %198 = vmatprep.subr.mxu0 0.0
    %199 = vmatpush1.xpose.msra.mxu0 0.0
    %200 = vmatprep.subr.mxu0 0.0
    %201 = vmatpush1.xpose.msra.mxu0 0.0
    %202 = vmatprep.subr.mxu0 0.0
    %203 = vmatpush1.xpose.msra.mxu0 0.0
    %204 = vmatprep.subr.mxu0 0.0
    %205 = vmatpush1.xpose.msra.mxu0 0.0
    %206 = vmatprep.subr.mxu0 0.0
    %207 = vmatpush1.xpose.msra.mxu0 0.0
    %208 = vmatprep.subr.mxu0 0.0
    %209 = vmatpush1.xpose.msra.mxu0 0.0
    %210 = vmatprep.subr.mxu0 0.0
    %211 = vmatpush1.xpose.msra.mxu0 0.0
    %212 = vmatprep.subr.mxu0 0.0
    %213 = vmatpush1.xpose.msra.mxu0 0.0
    %214 = vmatprep.subr.mxu0 0.0
    %215 = vmatpush1.xpose.msra.mxu0 0.0
    %216 = vmatprep.subr.mxu0 0.0
    %217 = vmatpush1.xpose.msra.mxu0 0.0
    %218 = vmatprep.subr.mxu0 0.0
    %219 = vmatpush1.xpose.msra.mxu0 0.0
    %220 = vmatprep.subr.mxu0 0.0
    %221 = vmatpush1.xpose.msra.mxu0 0.0
    %222 = vmatprep.subr.mxu0 0.0
    %223 = vmatpush1.xpose.msra.mxu0 0.0
    %224 = vmatprep.subr.mxu0 0.0
    %225 = vmatpush1.xpose.msra.mxu0 0.0
    %226 = vmatprep.subr.mxu0 0.0
    %227 = vmatpush1.xpose.msra.mxu0 0.0
    %228 = vmatprep.subr.mxu0 0.0
    %229 = vmatpush1.xpose.msra.mxu0 0.0
    %230 = vmatprep.subr.mxu0 0.0
    %231 = vmatpush1.xpose.msra.mxu0 0.0
    %232 = vmatprep.subr.mxu0 0.0
    %233 = vmatpush1.xpose.msra.mxu0 0.0
    %234 = vmatprep.subr.mxu0 0.0
    %235 = vmatpush1.xpose.msra.mxu0 0.0
    %236 = vmatprep.subr.mxu0 0.0
    %237 = vmatpush1.xpose.msra.mxu0 0.0
    %238 = vmatprep.subr.mxu0 0.0
    %239 = vmatpush1.xpose.msra.mxu0 0.0
    %240 = vmatprep.subr.mxu0 0.0
    %241 = vmatpush1.xpose.msra.mxu0 0.0
    %242 = vmatprep.subr.mxu0 0.0
    %243 = vmatpush1.xpose.msra.mxu0 0.0
    %244 = vmatprep.subr.mxu0 0.0
    %245 = vmatpush1.xpose.msra.mxu0 0.0
    %246 = vmatprep.subr.mxu0 0.0
    %247 = vmatpush1.xpose.msra.mxu0 0.0
    %248 = vmatprep.subr.mxu0 0.0
    %249 = vmatpush1.xpose.msra.mxu0 0.0
    %250 = vmatprep.subr.mxu0 0.0
    %251 = vmatpush1.xpose.msra.mxu0 0.0
    %252 = vmatprep.subr.mxu0 0.0
    %253 = vmatpush1.xpose.msra.mxu0 0.0
    %254 = vmatprep.mubr.f32.mxu0 0.0
    %255 = vmatmul.mubr.f32.gmra.mrb[0].mxu0 %v186
    %v256 = vpop.f32.mrb[0].mxu0
    %v257 = vadd.f32 0.0, %v256
    %v258 = vpop.f32.mrb[0].mxu0
    %259 = vdwg.mxu0
    %v260 = vsel %vm181, %v257, -9e+15
    %v261 = vsel %vm185, %v260, -inf
    %262 = vmax.xlane.f32.xlu0 %v261
    %v263 = vpop.xlane.xlu0 %262
    %v264 = vsub.f32 %v260, %v263
    %v265 = vmul.f32 %v264, 1.442695
    %v266 = vpow.pop %v265
    %v267 = vsel %vm185, %v266, 0.0
    %268 = vadd.xlane.f32.xlu0 %v267
    %v269 = vpop.xlane.xlu0 %268
    %v270 = vrcp.pop %v269
    %v271 = vmul.f32 %v266, %v270
    %272 = vrot.lane.b32.xlu0 %v152, 64
    %v273 = vpop.permute.xlu0 %272
    %v276 = vsel %vm185, %v271, 0
    %278 = vmatprep.subr.mxu0 0.0
    %279 = vmatpush1.msra.mxu0 %v273
    %280 = vmatprep.subr.mxu0 0.0
    %281 = vmatpush1.msra.mxu0 0.0
    %282 = vmatprep.subr.mxu0 0.0
    %283 = vmatpush1.msra.mxu0 0.0
    %284 = vmatprep.subr.mxu0 0.0
    %285 = vmatpush1.msra.mxu0 0.0
    %286 = vmatprep.subr.mxu0 0.0
    %287 = vmatpush1.msra.mxu0 0.0
    %288 = vmatprep.subr.mxu0 0.0
    %289 = vmatpush1.msra.mxu0 0.0
    %290 = vmatprep.subr.mxu0 0.0
    %291 = vmatpush1.msra.mxu0 0.0
    %292 = vmatprep.subr.mxu0 0.0
    %293 = vmatpush1.msra.mxu0 0.0
    %294 = vmatprep.subr.mxu0 0.0
    %295 = vmatpush1.msra.mxu0 0.0
    %296 = vmatprep.subr.mxu0 0.0
    %297 = vmatpush1.msra.mxu0 0.0
    %298 = vmatprep.subr.mxu0 0.0
    %299 = vmatpush1.msra.mxu0 0.0
    %300 = vmatprep.subr.mxu0 0.0
    %301 = vmatpush1.msra.mxu0 0.0
    %302 = vmatprep.subr.mxu0 0.0
    %303 = vmatpush1.msra.mxu0 0.0
    %304 = vmatprep.subr.mxu0 0.0
    %305 = vmatpush1.msra.mxu0 0.0
    %306 = vmatprep.subr.mxu0 0.0
    %307 = vmatpush1.msra.mxu0 0.0
    %308 = vmatprep.subr.mxu0 0.0
    %309 = vmatpush1.msra.mxu0 0.0
    %310 = vmatprep.subr.mxu0 0.0
    %311 = vmatpush1.msra.mxu0 0.0
    %312 = vmatprep.subr.mxu0 0.0
    %313 = vmatpush1.msra.mxu0 0.0
    %314 = vmatprep.subr.mxu0 0.0
    %315 = vmatpush1.msra.mxu0 0.0
    %316 = vmatprep.subr.mxu0 0.0
    %317 = vmatpush1.msra.mxu0 0.0
    %318 = vmatprep.subr.mxu0 0.0
    %319 = vmatpush1.msra.mxu0 0.0
    %320 = vmatprep.subr.mxu0 0.0
    %321 = vmatpush1.msra.mxu0 0.0
    %322 = vmatprep.subr.mxu0 0.0
    %323 = vmatpush1.msra.mxu0 0.0
    %324 = vmatprep.subr.mxu0 0.0
    %325 = vmatpush1.msra.mxu0 0.0
    %326 = vmatprep.subr.mxu0 0.0
    %327 = vmatpush1.msra.mxu0 0.0
    %328 = vmatprep.subr.mxu0 0.0
    %329 = vmatpush1.msra.mxu0 0.0
    %330 = vmatprep.subr.mxu0 0.0
    %331 = vmatpush1.msra.mxu0 0.0
    %332 = vmatprep.subr.mxu0 0.0
    %333 = vmatpush1.msra.mxu0 0.0
    %334 = vmatprep.subr.mxu0 0.0
    %335 = vmatpush1.msra.mxu0 0.0
    %336 = vmatprep.subr.mxu0 0.0
    %337 = vmatpush1.msra.mxu0 0.0
    %338 = vmatprep.subr.mxu0 0.0
    %339 = vmatpush1.msra.mxu0 0.0
    %340 = vmatprep.subr.mxu0 0.0
    %341 = vmatpush1.msra.mxu0 0.0
    %342 = vmatprep.mubr.f32.mxu0 0.0
    %343 = vmatmul.mubr.f32.gmra.mrb[0].mxu0 %v276
    %v344 = vpop.f32.mrb[0].mxu0
    %v345 = vadd.f32 0.0, %v344
    %v346 = vpop.f32.mrb[0].mxu0
    %347 = vdwg.mxu0
    %348 = vrot.lane.b32.xlu0 %v152, 120
    %v349 = vpop.permute.xlu0 %348
    %350 = vrot.lane.b32.xlu0 %v152, 88
    %v351 = vpop.permute.xlu0 %350
    %v352 = vsel %vm185, %v349, 0
    %v354 = vsel %vm185, %v351, 0
    %356 = vmatprep.subr.mxu0 0.0
    %357 = vmatpush1.xpose.msra.mxu0 %v354
    %358 = vmatprep.subr.mxu0 0.0
    %359 = vmatpush1.xpose.msra.mxu0 0.0
    %360 = vmatprep.subr.mxu0 0.0
    %361 = vmatpush1.xpose.msra.mxu0 0.0
    %362 = vmatprep.subr.mxu0 0.0
    %363 = vmatpush1.xpose.msra.mxu0 0.0
    %364 = vmatprep.subr.mxu0 0.0
    %365 = vmatpush1.xpose.msra.mxu0 0.0
    %366 = vmatprep.subr.mxu0 0.0
    %367 = vmatpush1.xpose.msra.mxu0 0.0
    %368 = vmatprep.subr.mxu0 0.0
    %369 = vmatpush1.xpose.msra.mxu0 0.0
    %370 = vmatprep.subr.mxu0 0.0
    %371 = vmatpush1.xpose.msra.mxu0 0.0
    %372 = vmatprep.subr.mxu0 0.0
    %373 = vmatpush1.xpose.msra.mxu0 0.0
    %374 = vmatprep.subr.mxu0 0.0
    %375 = vmatpush1.xpose.msra.mxu0 0.0
    %376 = vmatprep.subr.mxu0 0.0
    %377 = vmatpush1.xpose.msra.mxu0 0.0
    %378 = vmatprep.subr.mxu0 0.0
    %379 = vmatpush1.xpose.msra.mxu0 0.0
    %380 = vmatprep.subr.mxu0 0.0
    %381 = vmatpush1.xpose.msra.mxu0 0.0
    %382 = vmatprep.subr.mxu0 0.0
    %383 = vmatpush1.xpose.msra.mxu0 0.0
    %384 = vmatprep.subr.mxu0 0.0
    %385 = vmatpush1.xpose.msra.mxu0 0.0
    %386 = vmatprep.subr.mxu0 0.0
    %387 = vmatpush1.xpose.msra.mxu0 0.0
    %388 = vmatprep.subr.mxu0 0.0
    %389 = vmatpush1.xpose.msra.mxu0 0.0
    %390 = vmatprep.subr.mxu0 0.0
    %391 = vmatpush1.xpose.msra.mxu0 0.0
    %392 = vmatprep.subr.mxu0 0.0
    %393 = vmatpush1.xpose.msra.mxu0 0.0
    %394 = vmatprep.subr.mxu0 0.0
    %395 = vmatpush1.xpose.msra.mxu0 0.0
    %396 = vmatprep.subr.mxu0 0.0
    %397 = vmatpush1.xpose.msra.mxu0 0.0
    %398 = vmatprep.subr.mxu0 0.0
    %399 = vmatpush1.xpose.msra.mxu0 0.0
    %400 = vmatprep.subr.mxu0 0.0
    %401 = vmatpush1.xpose.msra.mxu0 0.0
    %402 = vmatprep.subr.mxu0 0.0
    %403 = vmatpush1.xpose.msra.mxu0 0.0
    %404 = vmatprep.subr.mxu0 0.0
    %405 = vmatpush1.xpose.msra.mxu0 0.0
    %406 = vmatprep.subr.mxu0 0.0
    %407 = vmatpush1.xpose.msra.mxu0 0.0
    %408 = vmatprep.subr.mxu0 0.0
    %409 = vmatpush1.xpose.msra.mxu0 0.0
    %410 = vmatprep.subr.mxu0 0.0
    %411 = vmatpush1.xpose.msra.mxu0 0.0
    %412 = vmatprep.subr.mxu0 0.0
    %413 = vmatpush1.xpose.msra.mxu0 0.0
    %414 = vmatprep.subr.mxu0 0.0
    %415 = vmatpush1.xpose.msra.mxu0 0.0
    %416 = vmatprep.subr.mxu0 0.0
    %417 = vmatpush1.xpose.msra.mxu0 0.0
    %418 = vmatprep.subr.mxu0 0.0
    %419 = vmatpush1.xpose.msra.mxu0 0.0
    %420 = vmatprep.mubr.f32.mxu0 0.0
    %421 = vmatmul.mubr.f32.gmra.mrb[0].mxu0 %v352
    %v422 = vpop.f32.mrb[0].mxu0
    %v423 = vadd.f32 0.0, %v422
    %v424 = vpop.f32.mrb[0].mxu0
    %425 = vdwg.mxu0
    %v426 = vsel %vm181, %v423, -9e+15
    %v427 = vsel %vm185, %v426, -inf
    %428 = vmax.xlane.f32.xlu0 %v427
    %v429 = vpop.xlane.xlu0 %428
    %v430 = vsub.f32 %v426, %v429
    %v431 = vmul.f32 %v430, 1.442695
    %v432 = vpow.pop %v431
    %v433 = vsel %vm185, %v432, 0.0
    %434 = vadd.xlane.f32.xlu0 %v433
    %v435 = vpop.xlane.xlu0 %434
    %v436 = vrcp.pop %v435
    %v437 = vmul.f32 %v432, %v436
    %438 = vrot.lane.b32.xlu0 %v152, 56
    %v439 = vpop.permute.xlu0 %438
    %v442 = vsel %vm185, %v437, 0
    %444 = vmatprep.subr.mxu0 0.0
    %445 = vmatpush1.msra.mxu0 %v439
    %446 = vmatprep.subr.mxu0 0.0
    %447 = vmatpush1.msra.mxu0 0.0
    %448 = vmatprep.subr.mxu0 0.0
    %449 = vmatpush1.msra.mxu0 0.0
    %450 = vmatprep.subr.mxu0 0.0
    %451 = vmatpush1.msra.mxu0 0.0
    %452 = vmatprep.subr.mxu0 0.0
    %453 = vmatpush1.msra.mxu0 0.0
    %454 = vmatprep.subr.mxu0 0.0
    %455 = vmatpush1.msra.mxu0 0.0
    %456 = vmatprep.subr.mxu0 0.0
    %457 = vmatpush1.msra.mxu0 0.0
    %458 = vmatprep.subr.mxu0 0.0
    %459 = vmatpush1.msra.mxu0 0.0
    %460 = vmatprep.subr.mxu0 0.0
    %461 = vmatpush1.msra.mxu0 0.0
    %462 = vmatprep.subr.mxu0 0.0
    %463 = vmatpush1.msra.mxu0 0.0
    %464 = vmatprep.subr.mxu0 0.0
    %465 = vmatpush1.msra.mxu0 0.0
    %466 = vmatprep.subr.mxu0 0.0
    %467 = vmatpush1.msra.mxu0 0.0
    %468 = vmatprep.subr.mxu0 0.0
    %469 = vmatpush1.msra.mxu0 0.0
    %470 = vmatprep.subr.mxu0 0.0
    %471 = vmatpush1.msra.mxu0 0.0
    %472 = vmatprep.subr.mxu0 0.0
    %473 = vmatpush1.msra.mxu0 0.0
    %474 = vmatprep.subr.mxu0 0.0
    %475 = vmatpush1.msra.mxu0 0.0
    %476 = vmatprep.subr.mxu0 0.0
    %477 = vmatpush1.msra.mxu0 0.0
    %478 = vmatprep.subr.mxu0 0.0
    %479 = vmatpush1.msra.mxu0 0.0
    %480 = vmatprep.subr.mxu0 0.0
    %481 = vmatpush1.msra.mxu0 0.0
    %482 = vmatprep.subr.mxu0 0.0
    %483 = vmatpush1.msra.mxu0 0.0
    %484 = vmatprep.subr.mxu0 0.0
    %485 = vmatpush1.msra.mxu0 0.0
    %486 = vmatprep.subr.mxu0 0.0
    %487 = vmatpush1.msra.mxu0 0.0
    %488 = vmatprep.subr.mxu0 0.0
    %489 = vmatpush1.msra.mxu0 0.0
    %490 = vmatprep.subr.mxu0 0.0
    %491 = vmatpush1.msra.mxu0 0.0
    %492 = vmatprep.subr.mxu0 0.0
    %493 = vmatpush1.msra.mxu0 0.0
    %494 = vmatprep.subr.mxu0 0.0
    %495 = vmatpush1.msra.mxu0 0.0
    %496 = vmatprep.subr.mxu0 0.0
    %497 = vmatpush1.msra.mxu0 0.0
    %498 = vmatprep.subr.mxu0 0.0
    %499 = vmatpush1.msra.mxu0 0.0
    %500 = vmatprep.subr.mxu0 0.0
    %501 = vmatpush1.msra.mxu0 0.0
    %502 = vmatprep.subr.mxu0 0.0
    %503 = vmatpush1.msra.mxu0 0.0
    %504 = vmatprep.subr.mxu0 0.0
    %505 = vmatpush1.msra.mxu0 0.0
    %506 = vmatprep.subr.mxu0 0.0
    %507 = vmatpush1.msra.mxu0 0.0
    %508 = vmatprep.mubr.f32.mxu0 0.0
    %509 = vmatmul.mubr.f32.gmra.mrb[0].mxu0 %v442
    %v510 = vpop.f32.mrb[0].mxu0
    %v511 = vadd.f32 0.0, %v510
    %v512 = vpop.f32.mrb[0].mxu0
    %513 = vdwg.mxu0
    %v515 = vsel %vm185, %v511, 0
    %517 = vmatprep.subr.mxu0 0.0
    %518 = vmatpush1.msra.mxu0 %v161
    %519 = vmatprep.subr.mxu0 0.0
    %520 = vmatpush1.msra.mxu0 0.0
    %521 = vmatprep.subr.mxu0 0.0
    %522 = vmatpush1.msra.mxu0 0.0
    %523 = vmatprep.subr.mxu0 0.0
    %524 = vmatpush1.msra.mxu0 0.0
    %525 = vmatprep.subr.mxu0 0.0
    %526 = vmatpush1.msra.mxu0 0.0
    %527 = vmatprep.subr.mxu0 0.0
    %528 = vmatpush1.msra.mxu0 0.0
    %529 = vmatprep.subr.mxu0 0.0
    %530 = vmatpush1.msra.mxu0 0.0
    %531 = vmatprep.subr.mxu0 0.0
    %532 = vmatpush1.msra.mxu0 0.0
    %533 = vmatprep.subr.mxu0 0.0
    %534 = vmatpush1.msra.mxu0 0.0
    %535 = vmatprep.subr.mxu0 0.0
    %536 = vmatpush1.msra.mxu0 0.0
    %537 = vmatprep.subr.mxu0 0.0
    %538 = vmatpush1.msra.mxu0 0.0
    %539 = vmatprep.subr.mxu0 0.0
    %540 = vmatpush1.msra.mxu0 0.0
    %541 = vmatprep.subr.mxu0 0.0
    %542 = vmatpush1.msra.mxu0 0.0
    %543 = vmatprep.subr.mxu0 0.0
    %544 = vmatpush1.msra.mxu0 0.0
    %545 = vmatprep.subr.mxu0 0.0
    %546 = vmatpush1.msra.mxu0 0.0
    %547 = vmatprep.subr.mxu0 0.0
    %548 = vmatpush1.msra.mxu0 0.0
    %549 = vmatprep.subr.mxu0 0.0
    %550 = vmatpush1.msra.mxu0 0.0
    %551 = vmatprep.subr.mxu0 0.0
    %552 = vmatpush1.msra.mxu0 0.0
    %553 = vmatprep.subr.mxu0 0.0
    %554 = vmatpush1.msra.mxu0 0.0
    %555 = vmatprep.subr.mxu0 0.0
    %556 = vmatpush1.msra.mxu0 0.0
    %557 = vmatprep.subr.mxu0 0.0
    %558 = vmatpush1.msra.mxu0 0.0
    %559 = vmatprep.subr.mxu0 0.0
    %560 = vmatpush1.msra.mxu0 0.0
    %561 = vmatprep.subr.mxu0 0.0
    %562 = vmatpush1.msra.mxu0 0.0
    %563 = vmatprep.subr.mxu0 0.0
    %564 = vmatpush1.msra.mxu0 0.0
    %565 = vmatprep.subr.mxu0 0.0
    %566 = vmatpush1.msra.mxu0 0.0
    %567 = vmatprep.subr.mxu0 0.0
    %568 = vmatpush1.msra.mxu0 0.0
    %569 = vmatprep.subr.mxu0 0.0
    %570 = vmatpush1.msra.mxu0 0.0
    %571 = vmatprep.subr.mxu0 0.0
    %572 = vmatpush1.msra.mxu0 0.0
    %573 = vmatprep.subr.mxu0 0.0
    %574 = vmatpush1.msra.mxu0 0.0
    %575 = vmatprep.subr.mxu0 0.0
    %576 = vmatpush1.msra.mxu0 0.0
    %577 = vmatprep.subr.mxu0 0.0
    %578 = vmatpush1.msra.mxu0 0.0
    %579 = vmatprep.subr.mxu0 0.0
    %580 = vmatpush1.msra.mxu0 0.0
    %581 = vmatprep.mubr.f32.mxu0 0.0
    %582 = vmatmul.mubr.f32.gmra.mrb[0].mxu0 %v515
    %v583 = vpop.f32.mrb[0].mxu0
    %v584 = vadd.f32 0.0, %v583
    %v585 = vpop.f32.mrb[0].mxu0
    %586 = vdwg.mxu0
    %v588 = vsel %vm185, %v345, 0
    %590 = vmatprep.subr.mxu0 0.0
    %591 = vmatpush1.msra.mxu0 %v160
    %592 = vmatprep.subr.mxu0 0.0
    %593 = vmatpush1.msra.mxu0 0.0
    %594 = vmatprep.subr.mxu0 0.0
    %595 = vmatpush1.msra.mxu0 0.0
    %596 = vmatprep.subr.mxu0 0.0
    %597 = vmatpush1.msra.mxu0 0.0
    %598 = vmatprep.subr.mxu0 0.0
    %599 = vmatpush1.msra.mxu0 0.0
    %600 = vmatprep.subr.mxu0 0.0
    %601 = vmatpush1.msra.mxu0 0.0
    %602 = vmatprep.subr.mxu0 0.0
    %603 = vmatpush1.msra.mxu0 0.0
    %604 = vmatprep.subr.mxu0 0.0
    %605 = vmatpush1.msra.mxu0 0.0
    %606 = vmatprep.subr.mxu0 0.0
    %607 = vmatpush1.msra.mxu0 0.0
    %608 = vmatprep.subr.mxu0 0.0
    %609 = vmatpush1.msra.mxu0 0.0
    %610 = vmatprep.subr.mxu0 0.0
    %611 = vmatpush1.msra.mxu0 0.0
    %612 = vmatprep.subr.mxu0 0.0
    %613 = vmatpush1.msra.mxu0 0.0
    %614 = vmatprep.subr.mxu0 0.0
    %615 = vmatpush1.msra.mxu0 0.0
    %616 = vmatprep.subr.mxu0 0.0
    %617 = vmatpush1.msra.mxu0 0.0
    %618 = vmatprep.subr.mxu0 0.0
    %619 = vmatpush1.msra.mxu0 0.0
    %620 = vmatprep.subr.mxu0 0.0
    %621 = vmatpush1.msra.mxu0 0.0
    %622 = vmatprep.subr.mxu0 0.0
    %623 = vmatpush1.msra.mxu0 0.0
    %624 = vmatprep.subr.mxu0 0.0
    %625 = vmatpush1.msra.mxu0 0.0
    %626 = vmatprep.subr.mxu0 0.0
    %627 = vmatpush1.msra.mxu0 0.0
    %628 = vmatprep.subr.mxu0 0.0
    %629 = vmatpush1.msra.mxu0 0.0
    %630 = vmatprep.subr.mxu0 0.0
    %631 = vmatpush1.msra.mxu0 0.0
    %632 = vmatprep.subr.mxu0 0.0
    %633 = vmatpush1.msra.mxu0 0.0
    %634 = vmatprep.subr.mxu0 0.0
    %635 = vmatpush1.msra.mxu0 0.0
    %636 = vmatprep.subr.mxu0 0.0
    %637 = vmatpush1.msra.mxu0 0.0
    %638 = vmatprep.subr.mxu0 0.0
    %639 = vmatpush1.msra.mxu0 0.0
    %640 = vmatprep.subr.mxu0 0.0
    %641 = vmatpush1.msra.mxu0 0.0
    %642 = vmatprep.subr.mxu0 0.0
    %643 = vmatpush1.msra.mxu0 0.0
    %644 = vmatprep.subr.mxu0 0.0
    %645 = vmatpush1.msra.mxu0 0.0
    %646 = vmatprep.subr.mxu0 0.0
    %647 = vmatpush1.msra.mxu0 0.0
    %648 = vmatprep.subr.mxu0 0.0
    %649 = vmatpush1.msra.mxu0 0.0
    %650 = vmatprep.subr.mxu0 0.0
    %651 = vmatpush1.msra.mxu0 0.0
    %652 = vmatprep.subr.mxu0 0.0
    %653 = vmatpush1.msra.mxu0 0.0
    %654 = vmatprep.mubr.f32.mxu0 0.0
    %655 = vmatmul.mubr.f32.gmra.mrb[0].mxu0 %v588
    %v656 = vpop.f32.mrb[0].mxu0
    %v657 = vadd.f32 %v584, %v656
    %v658 = vpop.f32.mrb[0].mxu0
    %659 = vdwg.mxu0
    %660 = vrot.lane.b32.xlu0 %v152, 112
    %v661 = vpop.permute.xlu0 %660
    %662 = vrot.lane.b32.xlu0 %v152, 80
    %v663 = vpop.permute.xlu0 %662
    %v664 = vsel %vm185, %v661, 0
    %v666 = vsel %vm185, %v663, 0
    %668 = vmatprep.subr.mxu0 0.0
    %669 = vmatpush1.xpose.msra.mxu0 %v666
    %670 = vmatprep.subr.mxu0 0.0
    %671 = vmatpush1.xpose.msra.mxu0 0.0
    %672 = vmatprep.subr.mxu0 0.0
    %673 = vmatpush1.xpose.msra.mxu0 0.0
    %674 = vmatprep.subr.mxu0 0.0
    %675 = vmatpush1.xpose.msra.mxu0 0.0
    %676 = vmatprep.subr.mxu0 0.0
    %677 = vmatpush1.xpose.msra.mxu0 0.0
    %678 = vmatprep.subr.mxu0 0.0
    %679 = vmatpush1.xpose.msra.mxu0 0.0
    %680 = vmatprep.subr.mxu0 0.0
    %681 = vmatpush1.xpose.msra.mxu0 0.0
    %682 = vmatprep.subr.mxu0 0.0
    %683 = vmatpush1.xpose.msra.mxu0 0.0
    %684 = vmatprep.subr.mxu0 0.0
    %685 = vmatpush1.xpose.msra.mxu0 0.0
    %686 = vmatprep.subr.mxu0 0.0
    %687 = vmatpush1.xpose.msra.mxu0 0.0
    %688 = vmatprep.subr.mxu0 0.0
    %689 = vmatpush1.xpose.msra.mxu0 0.0
    %690 = vmatprep.subr.mxu0 0.0
    %691 = vmatpush1.xpose.msra.mxu0 0.0
    %692 = vmatprep.subr.mxu0 0.0
    %693 = vmatpush1.xpose.msra.mxu0 0.0
    %694 = vmatprep.subr.mxu0 0.0
    %695 = vmatpush1.xpose.msra.mxu0 0.0
    %696 = vmatprep.subr.mxu0 0.0
    %697 = vmatpush1.xpose.msra.mxu0 0.0
    %698 = vmatprep.subr.mxu0 0.0
    %699 = vmatpush1.xpose.msra.mxu0 0.0
    %700 = vmatprep.subr.mxu0 0.0
    %701 = vmatpush1.xpose.msra.mxu0 0.0
    %702 = vmatprep.subr.mxu0 0.0
    %703 = vmatpush1.xpose.msra.mxu0 0.0
    %704 = vmatprep.subr.mxu0 0.0
    %705 = vmatpush1.xpose.msra.mxu0 0.0
    %706 = vmatprep.subr.mxu0 0.0
    %707 = vmatpush1.xpose.msra.mxu0 0.0
    %708 = vmatprep.subr.mxu0 0.0
    %709 = vmatpush1.xpose.msra.mxu0 0.0
    %710 = vmatprep.subr.mxu0 0.0
    %711 = vmatpush1.xpose.msra.mxu0 0.0
    %712 = vmatprep.subr.mxu0 0.0
    %713 = vmatpush1.xpose.msra.mxu0 0.0
    %714 = vmatprep.subr.mxu0 0.0
    %715 = vmatpush1.xpose.msra.mxu0 0.0
    %716 = vmatprep.subr.mxu0 0.0
    %717 = vmatpush1.xpose.msra.mxu0 0.0
    %718 = vmatprep.subr.mxu0 0.0
    %719 = vmatpush1.xpose.msra.mxu0 0.0
    %720 = vmatprep.subr.mxu0 0.0
    %721 = vmatpush1.xpose.msra.mxu0 0.0
    %722 = vmatprep.subr.mxu0 0.0
    %723 = vmatpush1.xpose.msra.mxu0 0.0
    %724 = vmatprep.subr.mxu0 0.0
    %725 = vmatpush1.xpose.msra.mxu0 0.0
    %726 = vmatprep.subr.mxu0 0.0
    %727 = vmatpush1.xpose.msra.mxu0 0.0
    %728 = vmatprep.subr.mxu0 0.0
    %729 = vmatpush1.xpose.msra.mxu0 0.0
    %730 = vmatprep.subr.mxu0 0.0
    %731 = vmatpush1.xpose.msra.mxu0 0.0
    %732 = vmatprep.mubr.f32.mxu0 0.0
    %733 = vmatmul.mubr.f32.gmra.mrb[0].mxu0 %v664
    %v734 = vpop.f32.mrb[0].mxu0
    %v735 = vadd.f32 0.0, %v734
    %v736 = vpop.f32.mrb[0].mxu0
    %737 = vdwg.mxu0
    %v738 = vsel %vm181, %v735, -9e+15
    %v739 = vsel %vm185, %v738, -inf
    %740 = vmax.xlane.f32.xlu0 %v739
    %v741 = vpop.xlane.xlu0 %740
    %v742 = vsub.f32 %v738, %v741
    %v743 = vmul.f32 %v742, 1.442695
    %v744 = vpow.pop %v743
    %v745 = vsel %vm185, %v744, 0.0
    %746 = vadd.xlane.f32.xlu0 %v745
    %v747 = vpop.xlane.xlu0 %746
    %v748 = vrcp.pop %v747
    %v749 = vmul.f32 %v744, %v748
    %750 = vrot.lane.b32.xlu0 %v152, 48
    %v751 = vpop.permute.xlu0 %750
    %v754 = vsel %vm185, %v749, 0
    %756 = vmatprep.subr.mxu0 0.0
    %757 = vmatpush1.msra.mxu0 %v751
    %758 = vmatprep.subr.mxu0 0.0
    %759 = vmatpush1.msra.mxu0 0.0
    %760 = vmatprep.subr.mxu0 0.0
    %761 = vmatpush1.msra.mxu0 0.0
    %762 = vmatprep.subr.mxu0 0.0
    %763 = vmatpush1.msra.mxu0 0.0
    %764 = vmatprep.subr.mxu0 0.0
    %765 = vmatpush1.msra.mxu0 0.0
    %766 = vmatprep.subr.mxu0 0.0
    %767 = vmatpush1.msra.mxu0 0.0
    %768 = vmatprep.subr.mxu0 0.0
    %769 = vmatpush1.msra.mxu0 0.0
    %770 = vmatprep.subr.mxu0 0.0
    %771 = vmatpush1.msra.mxu0 0.0
    %772 = vmatprep.subr.mxu0 0.0
    %773 = vmatpush1.msra.mxu0 0.0
    %774 = vmatprep.subr.mxu0 0.0
    %775 = vmatpush1.msra.mxu0 0.0
    %776 = vmatprep.subr.mxu0 0.0
    %777 = vmatpush1.msra.mxu0 0.0
    %778 = vmatprep.subr.mxu0 0.0
    %779 = vmatpush1.msra.mxu0 0.0
    %780 = vmatprep.subr.mxu0 0.0
    %781 = vmatpush1.msra.mxu0 0.0
    %782 = vmatprep.subr.mxu0 0.0
    %783 = vmatpush1.msra.mxu0 0.0
    %784 = vmatprep.subr.mxu0 0.0
    %785 = vmatpush1.msra.mxu0 0.0
    %786 = vmatprep.subr.mxu0 0.0
    %787 = vmatpush1.msra.mxu0 0.0
    %788 = vmatprep.subr.mxu0 0.0
    %789 = vmatpush1.msra.mxu0 0.0
    %790 = vmatprep.subr.mxu0 0.0
    %791 = vmatpush1.msra.mxu0 0.0
    %792 = vmatprep.subr.mxu0 0.0
    %793 = vmatpush1.msra.mxu0 0.0
    %794 = vmatprep.subr.mxu0 0.0
    %795 = vmatpush1.msra.mxu0 0.0
    %796 = vmatprep.subr.mxu0 0.0
    %797 = vmatpush1.msra.mxu0 0.0
    %798 = vmatprep.subr.mxu0 0.0
    %799 = vmatpush1.msra.mxu0 0.0
    %800 = vmatprep.subr.mxu0 0.0
    %801 = vmatpush1.msra.mxu0 0.0
    %802 = vmatprep.subr.mxu0 0.0
    %803 = vmatpush1.msra.mxu0 0.0
    %804 = vmatprep.subr.mxu0 0.0
    %805 = vmatpush1.msra.mxu0 0.0
    %806 = vmatprep.subr.mxu0 0.0
    %807 = vmatpush1.msra.mxu0 0.0
    %808 = vmatprep.subr.mxu0 0.0
    %809 = vmatpush1.msra.mxu0 0.0
    %810 = vmatprep.subr.mxu0 0.0
    %811 = vmatpush1.msra.mxu0 0.0
    %812 = vmatprep.subr.mxu0 0.0
    %813 = vmatpush1.msra.mxu0 0.0
    %814 = vmatprep.subr.mxu0 0.0
    %815 = vmatpush1.msra.mxu0 0.0
    %816 = vmatprep.subr.mxu0 0.0
    %817 = vmatpush1.msra.mxu0 0.0
    %818 = vmatprep.subr.mxu0 0.0
    %819 = vmatpush1.msra.mxu0 0.0
    %820 = vmatprep.mubr.f32.mxu0 0.0
    %821 = vmatmul.mubr.f32.gmra.mrb[0].mxu0 %v754
    %v822 = vpop.f32.mrb[0].mxu0
    %v823 = vadd.f32 0.0, %v822
    %v824 = vpop.f32.mrb[0].mxu0
    %825 = vdwg.mxu0
    %v827 = vsel %vm185, %v823, 0
    %829 = vmatprep.subr.mxu0 0.0
    %830 = vmatpush1.msra.mxu0 %v162
    %831 = vmatprep.subr.mxu0 0.0
    %832 = vmatpush1.msra.mxu0 0.0
    %833 = vmatprep.subr.mxu0 0.0
    %834 = vmatpush1.msra.mxu0 0.0
    %835 = vmatprep.subr.mxu0 0.0
    %836 = vmatpush1.msra.mxu0 0.0
    %837 = vmatprep.subr.mxu0 0.0
    %838 = vmatpush1.msra.mxu0 0.0
    %839 = vmatprep.subr.mxu0 0.0
    %840 = vmatpush1.msra.mxu0 0.0
    %841 = vmatprep.subr.mxu0 0.0
    %842 = vmatpush1.msra.mxu0 0.0
    %843 = vmatprep.subr.mxu0 0.0
    %844 = vmatpush1.msra.mxu0 0.0
    %845 = vmatprep.subr.mxu0 0.0
    %846 = vmatpush1.msra.mxu0 0.0
    %847 = vmatprep.subr.mxu0 0.0
    %848 = vmatpush1.msra.mxu0 0.0
    %849 = vmatprep.subr.mxu0 0.0
    %850 = vmatpush1.msra.mxu0 0.0
    %851 = vmatprep.subr.mxu0 0.0
    %852 = vmatpush1.msra.mxu0 0.0
    %853 = vmatprep.subr.mxu0 0.0
    %854 = vmatpush1.msra.mxu0 0.0
    %855 = vmatprep.subr.mxu0 0.0
    %856 = vmatpush1.msra.mxu0 0.0
    %857 = vmatprep.subr.mxu0 0.0
    %858 = vmatpush1.msra.mxu0 0.0
    %859 = vmatprep.subr.mxu0 0.0
    %860 = vmatpush1.msra.mxu0 0.0
    %861 = vmatprep.subr.mxu0 0.0
    %862 = vmatpush1.msra.mxu0 0.0
    %863 = vmatprep.subr.mxu0 0.0
    %864 = vmatpush1.msra.mxu0 0.0
    %865 = vmatprep.subr.mxu0 0.0
    %866 = vmatpush1.msra.mxu0 0.0
    %867 = vmatprep.subr.mxu0 0.0
    %868 = vmatpush1.msra.mxu0 0.0
    %869 = vmatprep.subr.mxu0 0.0
    %870 = vmatpush1.msra.mxu0 0.0
    %871 = vmatprep.subr.mxu0 0.0
    %872 = vmatpush1.msra.mxu0 0.0
    %873 = vmatprep.subr.mxu0 0.0
    %874 = vmatpush1.msra.mxu0 0.0
    %875 = vmatprep.subr.mxu0 0.0
    %876 = vmatpush1.msra.mxu0 0.0
    %877 = vmatprep.subr.mxu0 0.0
    %878 = vmatpush1.msra.mxu0 0.0
    %879 = vmatprep.subr.mxu0 0.0
    %880 = vmatpush1.msra.mxu0 0.0
    %881 = vmatprep.subr.mxu0 0.0
    %882 = vmatpush1.msra.mxu0 0.0
    %883 = vmatprep.subr.mxu0 0.0
    %884 = vmatpush1.msra.mxu0 0.0
    %885 = vmatprep.subr.mxu0 0.0
    %886 = vmatpush1.msra.mxu0 0.0
    %887 = vmatprep.subr.mxu0 0.0
    %888 = vmatpush1.msra.mxu0 0.0
    %889 = vmatprep.subr.mxu0 0.0
    %890 = vmatpush1.msra.mxu0 0.0
    %891 = vmatprep.subr.mxu0 0.0
    %892 = vmatpush1.msra.mxu0 0.0
    %893 = vmatprep.mubr.f32.mxu0 0.0
    %894 = vmatmul.mubr.f32.gmra.mrb[0].mxu0 %v827
    %v895 = vpop.f32.mrb[0].mxu0
    %v896 = vadd.f32 0.0, %v895
    %v897 = vpop.f32.mrb[0].mxu0
    %898 = vdwg.mxu0
    %v899 = vadd.f32 %v657, %v896
    %900 = vrot.lane.b32.xlu0 %v152, 104
    %v901 = vpop.permute.xlu0 %900
    %902 = vrot.lane.b32.xlu0 %v152, 72
    %v903 = vpop.permute.xlu0 %902
    %v904 = vsel %vm185, %v901, 0
    %v906 = vsel %vm185, %v903, 0
    %908 = vmatprep.subr.mxu0 0.0
    %909 = vmatpush1.xpose.msra.mxu0 %v906
    %910 = vmatprep.subr.mxu0 0.0
    %911 = vmatpush1.xpose.msra.mxu0 0.0
    %912 = vmatprep.subr.mxu0 0.0
    %913 = vmatpush1.xpose.msra.mxu0 0.0
    %914 = vmatprep.subr.mxu0 0.0
    %915 = vmatpush1.xpose.msra.mxu0 0.0
    %916 = vmatprep.subr.mxu0 0.0
    %917 = vmatpush1.xpose.msra.mxu0 0.0
    %918 = vmatprep.subr.mxu0 0.0
    %919 = vmatpush1.xpose.msra.mxu0 0.0
    %920 = vmatprep.subr.mxu0 0.0
    %921 = vmatpush1.xpose.msra.mxu0 0.0
    %922 = vmatprep.subr.mxu0 0.0
    %923 = vmatpush1.xpose.msra.mxu0 0.0
    %924 = vmatprep.subr.mxu0 0.0
    %925 = vmatpush1.xpose.msra.mxu0 0.0
    %926 = vmatprep.subr.mxu0 0.0
    %927 = vmatpush1.xpose.msra.mxu0 0.0
    %928 = vmatprep.subr.mxu0 0.0
    %929 = vmatpush1.xpose.msra.mxu0 0.0
    %930 = vmatprep.subr.mxu0 0.0
    %931 = vmatpush1.xpose.msra.mxu0 0.0
    %932 = vmatprep.subr.mxu0 0.0
    %933 = vmatpush1.xpose.msra.mxu0 0.0
    %934 = vmatprep.subr.mxu0 0.0
    %935 = vmatpush1.xpose.msra.mxu0 0.0
    %936 = vmatprep.subr.mxu0 0.0
    %937 = vmatpush1.xpose.msra.mxu0 0.0
    %938 = vmatprep.subr.mxu0 0.0
    %939 = vmatpush1.xpose.msra.mxu0 0.0
    %940 = vmatprep.subr.mxu0 0.0
    %941 = vmatpush1.xpose.msra.mxu0 0.0
    %942 = vmatprep.subr.mxu0 0.0
    %943 = vmatpush1.xpose.msra.mxu0 0.0
    %944 = vmatprep.subr.mxu0 0.0
    %945 = vmatpush1.xpose.msra.mxu0 0.0
    %946 = vmatprep.subr.mxu0 0.0
    %947 = vmatpush1.xpose.msra.mxu0 0.0
    %948 = vmatprep.subr.mxu0 0.0
    %949 = vmatpush1.xpose.msra.mxu0 0.0
    %950 = vmatprep.subr.mxu0 0.0
    %951 = vmatpush1.xpose.msra.mxu0 0.0
    %952 = vmatprep.subr.mxu0 0.0
    %953 = vmatpush1.xpose.msra.mxu0 0.0
    %954 = vmatprep.subr.mxu0 0.0
    %955 = vmatpush1.xpose.msra.mxu0 0.0
    %956 = vmatprep.subr.mxu0 0.0
    %957 = vmatpush1.xpose.msra.mxu0 0.0
    %958 = vmatprep.subr.mxu0 0.0
    %959 = vmatpush1.xpose.msra.mxu0 0.0
    %960 = vmatprep.subr.mxu0 0.0
    %961 = vmatpush1.xpose.msra.mxu0 0.0
    %962 = vmatprep.subr.mxu0 0.0
    %963 = vmatpush1.xpose.msra.mxu0 0.0
    %964 = vmatprep.subr.mxu0 0.0
    %965 = vmatpush1.xpose.msra.mxu0 0.0
    %966 = vmatprep.subr.mxu0 0.0
    %967 = vmatpush1.xpose.msra.mxu0 0.0
    %968 = vmatprep.subr.mxu0 0.0
    %969 = vmatpush1.xpose.msra.mxu0 0.0
    %970 = vmatprep.subr.mxu0 0.0
    %971 = vmatpush1.xpose.msra.mxu0 0.0
    %972 = vmatprep.mubr.f32.mxu0 0.0
    %973 = vmatmul.mubr.f32.gmra.mrb[0].mxu0 %v904
    %v974 = vpop.f32.mrb[0].mxu0
    %v975 = vadd.f32 0.0, %v974
    %v976 = vpop.f32.mrb[0].mxu0
    %977 = vdwg.mxu0
    %v978 = vsel %vm181, %v975, -9e+15
    %v979 = vsel %vm185, %v978, -inf
    %980 = vmax.xlane.f32.xlu0 %v979
    %v981 = vpop.xlane.xlu0 %980
    %v982 = vsub.f32 %v978, %v981
    %v983 = vmul.f32 %v982, 1.442695
    %v984 = vpow.pop %v983
    %v985 = vsel %vm185, %v984, 0.0
    %986 = vadd.xlane.f32.xlu0 %v985
    %v987 = vpop.xlane.xlu0 %986
    %v988 = vrcp.pop %v987
    %v989 = vmul.f32 %v984, %v988
    %990 = vrot.lane.b32.xlu0 %v152, 40
    %v991 = vpop.permute.xlu0 %990
    %v994 = vsel %vm185, %v989, 0
    %996 = vmatprep.subr.mxu0 0.0
    %997 = vmatpush1.msra.mxu0 %v991
    %998 = vmatprep.subr.mxu0 0.0
    %999 = vmatpush1.msra.mxu0 0.0
    %1000 = vmatprep.subr.mxu0 0.0
    %1001 = vmatpush1.msra.mxu0 0.0
    %1002 = vmatprep.subr.mxu0 0.0
    %1003 = vmatpush1.msra.mxu0 0.0
    %1004 = vmatprep.subr.mxu0 0.0
    %1005 = vmatpush1.msra.mxu0 0.0
    %1006 = vmatprep.subr.mxu0 0.0
    %1007 = vmatpush1.msra.mxu0 0.0
    %1008 = vmatprep.subr.mxu0 0.0
    %1009 = vmatpush1.msra.mxu0 0.0
    %1010 = vmatprep.subr.mxu0 0.0
    %1011 = vmatpush1.msra.mxu0 0.0
    %1012 = vmatprep.subr.mxu0 0.0
    %1013 = vmatpush1.msra.mxu0 0.0
    %1014 = vmatprep.subr.mxu0 0.0
    %1015 = vmatpush1.msra.mxu0 0.0
    %1016 = vmatprep.subr.mxu0 0.0
    %1017 = vmatpush1.msra.mxu0 0.0
    %1018 = vmatprep.subr.mxu0 0.0
    %1019 = vmatpush1.msra.mxu0 0.0
    %1020 = vmatprep.subr.mxu0 0.0
    %1021 = vmatpush1.msra.mxu0 0.0
    %1022 = vmatprep.subr.mxu0 0.0
    %1023 = vmatpush1.msra.mxu0 0.0
    %1024 = vmatprep.subr.mxu0 0.0
    %1025 = vmatpush1.msra.mxu0 0.0
    %1026 = vmatprep.subr.mxu0 0.0
    %1027 = vmatpush1.msra.mxu0 0.0
    %1028 = vmatprep.subr.mxu0 0.0
    %1029 = vmatpush1.msra.mxu0 0.0
    %1030 = vmatprep.subr.mxu0 0.0
    %1031 = vmatpush1.msra.mxu0 0.0
    %1032 = vmatprep.subr.mxu0 0.0
    %1033 = vmatpush1.msra.mxu0 0.0
    %1034 = vmatprep.subr.mxu0 0.0
    %1035 = vmatpush1.msra.mxu0 0.0
    %1036 = vmatprep.subr.mxu0 0.0
    %1037 = vmatpush1.msra.mxu0 0.0
    %1038 = vmatprep.subr.mxu0 0.0
    %1039 = vmatpush1.msra.mxu0 0.0
    %1040 = vmatprep.subr.mxu0 0.0
    %1041 = vmatpush1.msra.mxu0 0.0
    %1042 = vmatprep.subr.mxu0 0.0
    %1043 = vmatpush1.msra.mxu0 0.0
    %1044 = vmatprep.subr.mxu0 0.0
    %1045 = vmatpush1.msra.mxu0 0.0
    %1046 = vmatprep.subr.mxu0 0.0
    %1047 = vmatpush1.msra.mxu0 0.0
    %1048 = vmatprep.subr.mxu0 0.0
    %1049 = vmatpush1.msra.mxu0 0.0
    %1050 = vmatprep.subr.mxu0 0.0
    %1051 = vmatpush1.msra.mxu0 0.0
    %1052 = vmatprep.subr.mxu0 0.0
    %1053 = vmatpush1.msra.mxu0 0.0
    %1054 = vmatprep.subr.mxu0 0.0
    %1055 = vmatpush1.msra.mxu0 0.0
    %1056 = vmatprep.subr.mxu0 0.0
    %1057 = vmatpush1.msra.mxu0 0.0
    %1058 = vmatprep.subr.mxu0 0.0
    %1059 = vmatpush1.msra.mxu0 0.0
    %1060 = vmatprep.mubr.f32.mxu0 0.0
    %1061 = vmatmul.mubr.f32.gmra.mrb[0].mxu0 %v994
    %v1062 = vpop.f32.mrb[0].mxu0
    %v1063 = vadd.f32 0.0, %v1062
    %v1064 = vpop.f32.mrb[0].mxu0
    %1065 = vdwg.mxu0
    %v1067 = vsel %vm185, %v1063, 0
    %1069 = vmatprep.subr.mxu0 0.0
    %1070 = vmatpush1.msra.mxu0 %v163
    %1071 = vmatprep.subr.mxu0 0.0
    %1072 = vmatpush1.msra.mxu0 0.0
    %1073 = vmatprep.subr.mxu0 0.0
    %1074 = vmatpush1.msra.mxu0 0.0
    %1075 = vmatprep.subr.mxu0 0.0
    %1076 = vmatpush1.msra.mxu0 0.0
    %1077 = vmatprep.subr.mxu0 0.0
    %1078 = vmatpush1.msra.mxu0 0.0
    %1079 = vmatprep.subr.mxu0 0.0
    %1080 = vmatpush1.msra.mxu0 0.0
    %1081 = vmatprep.subr.mxu0 0.0
    %1082 = vmatpush1.msra.mxu0 0.0
    %1083 = vmatprep.subr.mxu0 0.0
    %1084 = vmatpush1.msra.mxu0 0.0
    %1085 = vmatprep.subr.mxu0 0.0
    %1086 = vmatpush1.msra.mxu0 0.0
    %1087 = vmatprep.subr.mxu0 0.0
    %1088 = vmatpush1.msra.mxu0 0.0
    %1089 = vmatprep.subr.mxu0 0.0
    %1090 = vmatpush1.msra.mxu0 0.0
    %1091 = vmatprep.subr.mxu0 0.0
    %1092 = vmatpush1.msra.mxu0 0.0
    %1093 = vmatprep.subr.mxu0 0.0
    %1094 = vmatpush1.msra.mxu0 0.0
    %1095 = vmatprep.subr.mxu0 0.0
    %1096 = vmatpush1.msra.mxu0 0.0
    %1097 = vmatprep.subr.mxu0 0.0
    %1098 = vmatpush1.msra.mxu0 0.0
    %1099 = vmatprep.subr.mxu0 0.0
    %1100 = vmatpush1.msra.mxu0 0.0
    %1101 = vmatprep.subr.mxu0 0.0
    %1102 = vmatpush1.msra.mxu0 0.0
    %1103 = vmatprep.subr.mxu0 0.0
    %1104 = vmatpush1.msra.mxu0 0.0
    %1105 = vmatprep.subr.mxu0 0.0
    %1106 = vmatpush1.msra.mxu0 0.0
    %1107 = vmatprep.subr.mxu0 0.0
    %1108 = vmatpush1.msra.mxu0 0.0
    %1109 = vmatprep.subr.mxu0 0.0
    %1110 = vmatpush1.msra.mxu0 0.0
    %1111 = vmatprep.subr.mxu0 0.0
    %1112 = vmatpush1.msra.mxu0 0.0
    %1113 = vmatprep.subr.mxu0 0.0
    %1114 = vmatpush1.msra.mxu0 0.0
    %1115 = vmatprep.subr.mxu0 0.0
    %1116 = vmatpush1.msra.mxu0 0.0
    %1117 = vmatprep.subr.mxu0 0.0
    %1118 = vmatpush1.msra.mxu0 0.0
    %1119 = vmatprep.subr.mxu0 0.0
    %1120 = vmatpush1.msra.mxu0 0.0
    %1121 = vmatprep.subr.mxu0 0.0
    %1122 = vmatpush1.msra.mxu0 0.0
    %1123 = vmatprep.subr.mxu0 0.0
    %1124 = vmatpush1.msra.mxu0 0.0
    %1125 = vmatprep.subr.mxu0 0.0
    %1126 = vmatpush1.msra.mxu0 0.0
    %1127 = vmatprep.subr.mxu0 0.0
    %1128 = vmatpush1.msra.mxu0 0.0
    %1129 = vmatprep.subr.mxu0 0.0
    %1130 = vmatpush1.msra.mxu0 0.0
    %1131 = vmatprep.subr.mxu0 0.0
    %1132 = vmatpush1.msra.mxu0 0.0
    %1133 = vmatprep.mubr.f32.mxu0 0.0
    %1134 = vmatmul.mubr.f32.gmra.mrb[0].mxu0 %v1067
    %v1135 = vpop.f32.mrb[0].mxu0
    %v1136 = vadd.f32 0.0, %v1135
    %v1137 = vpop.f32.mrb[0].mxu0
    %1138 = vdwg.mxu0
    %v1139 = vadd.f32 %v899, %v1136
    %v1140 = vlaneseq
    %v1141 = vshrl.u32 %v1140, 7
    %v1142 = vsub.s32 1, %v1141
    %v1143 = vrot.slane %v175, %v1142
    %vm1144 = vcmp.eq.s32.totalorder %v1143, 1
    %vm1145 = vmand %vm173, %vm1144
    %1147 = vrot.lane.b32.xlu0 %v157, 96
    %v1148 = vpop.permute.xlu0 %1147
    %v1149 = vsel %vm185, %v157, 0
    %v1151 = vsel %vm185, %v1148, 0
    %1153 = vmatprep.subr.mxu0 0.0
    %1154 = vmatpush1.xpose.msra.mxu0 %v1151
    %1155 = vmatprep.subr.mxu0 0.0
    %1156 = vmatpush1.xpose.msra.mxu0 0.0
    %1157 = vmatprep.subr.mxu0 0.0
    %1158 = vmatpush1.xpose.msra.mxu0 0.0
    %1159 = vmatprep.subr.mxu0 0.0
    %1160 = vmatpush1.xpose.msra.mxu0 0.0
    %1161 = vmatprep.subr.mxu0 0.0
    %1162 = vmatpush1.xpose.msra.mxu0 0.0
    %1163 = vmatprep.subr.mxu0 0.0
    %1164 = vmatpush1.xpose.msra.mxu0 0.0
    %1165 = vmatprep.subr.mxu0 0.0
    %1166 = vmatpush1.xpose.msra.mxu0 0.0
    %1167 = vmatprep.subr.mxu0 0.0
    %1168 = vmatpush1.xpose.msra.mxu0 0.0
    %1169 = vmatprep.subr.mxu0 0.0
    %1170 = vmatpush1.xpose.msra.mxu0 0.0
    %1171 = vmatprep.subr.mxu0 0.0
    %1172 = vmatpush1.xpose.msra.mxu0 0.0
    %1173 = vmatprep.subr.mxu0 0.0
    %1174 = vmatpush1.xpose.msra.mxu0 0.0
    %1175 = vmatprep.subr.mxu0 0.0
    %1176 = vmatpush1.xpose.msra.mxu0 0.0
    %1177 = vmatprep.subr.mxu0 0.0
    %1178 = vmatpush1.xpose.msra.mxu0 0.0
    %1179 = vmatprep.subr.mxu0 0.0
    %1180 = vmatpush1.xpose.msra.mxu0 0.0
    %1181 = vmatprep.subr.mxu0 0.0
    %1182 = vmatpush1.xpose.msra.mxu0 0.0
    %1183 = vmatprep.subr.mxu0 0.0
    %1184 = vmatpush1.xpose.msra.mxu0 0.0
    %1185 = vmatprep.subr.mxu0 0.0
    %1186 = vmatpush1.xpose.msra.mxu0 0.0
    %1187 = vmatprep.subr.mxu0 0.0
    %1188 = vmatpush1.xpose.msra.mxu0 0.0
    %1189 = vmatprep.subr.mxu0 0.0
    %1190 = vmatpush1.xpose.msra.mxu0 0.0
    %1191 = vmatprep.subr.mxu0 0.0
    %1192 = vmatpush1.xpose.msra.mxu0 0.0
    %1193 = vmatprep.subr.mxu0 0.0
    %1194 = vmatpush1.xpose.msra.mxu0 0.0
    %1195 = vmatprep.subr.mxu0 0.0
    %1196 = vmatpush1.xpose.msra.mxu0 0.0
    %1197 = vmatprep.subr.mxu0 0.0
    %1198 = vmatpush1.xpose.msra.mxu0 0.0
    %1199 = vmatprep.subr.mxu0 0.0
    %1200 = vmatpush1.xpose.msra.mxu0 0.0
    %1201 = vmatprep.subr.mxu0 0.0
    %1202 = vmatpush1.xpose.msra.mxu0 0.0
    %1203 = vmatprep.subr.mxu0 0.0
    %1204 = vmatpush1.xpose.msra.mxu0 0.0
    %1205 = vmatprep.subr.mxu0 0.0
    %1206 = vmatpush1.xpose.msra.mxu0 0.0
    %1207 = vmatprep.subr.mxu0 0.0
    %1208 = vmatpush1.xpose.msra.mxu0 0.0
    %1209 = vmatprep.subr.mxu0 0.0
    %1210 = vmatpush1.xpose.msra.mxu0 0.0
    %1211 = vmatprep.subr.mxu0 0.0
    %1212 = vmatpush1.xpose.msra.mxu0 0.0
    %1213 = vmatprep.subr.mxu0 0.0
    %1214 = vmatpush1.xpose.msra.mxu0 0.0
    %1215 = vmatprep.subr.mxu0 0.0
    %1216 = vmatpush1.xpose.msra.mxu0 0.0
    %1217 = vmatprep.mubr.f32.mxu0 0.0
    %1218 = vmatmul.mubr.f32.gmra.mrb[0].mxu0 %v1149
    %v1219 = vpop.f32.mrb[0].mxu0
    %v1220 = vadd.f32 0.0, %v1219
    %v1221 = vpop.f32.mrb[0].mxu0
    %1222 = vdwg.mxu0
    %v1223 = vsel %vm1145, %v1220, -9e+15
    %v1224 = vsel %vm185, %v1223, -inf
    %1225 = vmax.xlane.f32.xlu0 %v1224
    %v1226 = vpop.xlane.xlu0 %1225
    %v1227 = vsub.f32 %v1223, %v1226
    %v1228 = vmul.f32 %v1227, 1.442695
    %v1229 = vpow.pop %v1228
    %v1230 = vsel %vm185, %v1229, 0.0
    %1231 = vadd.xlane.f32.xlu0 %v1230
    %v1232 = vpop.xlane.xlu0 %1231
    %v1233 = vrcp.pop %v1232
    %v1234 = vmul.f32 %v1229, %v1233
    %1235 = vrot.lane.b32.xlu0 %v157, 64
    %v1236 = vpop.permute.xlu0 %1235
    %v1239 = vsel %vm185, %v1234, 0
    %1241 = vmatprep.subr.mxu0 0.0
    %1242 = vmatpush1.msra.mxu0 %v1236
    %1243 = vmatprep.subr.mxu0 0.0
    %1244 = vmatpush1.msra.mxu0 0.0
    %1245 = vmatprep.subr.mxu0 0.0
    %1246 = vmatpush1.msra.mxu0 0.0
    %1247 = vmatprep.subr.mxu0 0.0
    %1248 = vmatpush1.msra.mxu0 0.0
    %1249 = vmatprep.subr.mxu0 0.0
    %1250 = vmatpush1.msra.mxu0 0.0
    %1251 = vmatprep.subr.mxu0 0.0
    %1252 = vmatpush1.msra.mxu0 0.0
    %1253 = vmatprep.subr.mxu0 0.0
    %1254 = vmatpush1.msra.mxu0 0.0
    %1255 = vmatprep.subr.mxu0 0.0
    %1256 = vmatpush1.msra.mxu0 0.0
    %1257 = vmatprep.subr.mxu0 0.0
    %1258 = vmatpush1.msra.mxu0 0.0
    %1259 = vmatprep.subr.mxu0 0.0
    %1260 = vmatpush1.msra.mxu0 0.0
    %1261 = vmatprep.subr.mxu0 0.0
    %1262 = vmatpush1.msra.mxu0 0.0
    %1263 = vmatprep.subr.mxu0 0.0
    %1264 = vmatpush1.msra.mxu0 0.0
    %1265 = vmatprep.subr.mxu0 0.0
    %1266 = vmatpush1.msra.mxu0 0.0
    %1267 = vmatprep.subr.mxu0 0.0
    %1268 = vmatpush1.msra.mxu0 0.0
    %1269 = vmatprep.subr.mxu0 0.0
    %1270 = vmatpush1.msra.mxu0 0.0
    %1271 = vmatprep.subr.mxu0 0.0
    %1272 = vmatpush1.msra.mxu0 0.0
    %1273 = vmatprep.subr.mxu0 0.0
    %1274 = vmatpush1.msra.mxu0 0.0
    %1275 = vmatprep.subr.mxu0 0.0
    %1276 = vmatpush1.msra.mxu0 0.0
    %1277 = vmatprep.subr.mxu0 0.0
    %1278 = vmatpush1.msra.mxu0 0.0
    %1279 = vmatprep.subr.mxu0 0.0
    %1280 = vmatpush1.msra.mxu0 0.0
    %1281 = vmatprep.subr.mxu0 0.0
    %1282 = vmatpush1.msra.mxu0 0.0
    %1283 = vmatprep.subr.mxu0 0.0
    %1284 = vmatpush1.msra.mxu0 0.0
    %1285 = vmatprep.subr.mxu0 0.0
    %1286 = vmatpush1.msra.mxu0 0.0
    %1287 = vmatprep.subr.mxu0 0.0
    %1288 = vmatpush1.msra.mxu0 0.0
    %1289 = vmatprep.subr.mxu0 0.0
    %1290 = vmatpush1.msra.mxu0 0.0
    %1291 = vmatprep.subr.mxu0 0.0
    %1292 = vmatpush1.msra.mxu0 0.0
    %1293 = vmatprep.subr.mxu0 0.0
    %1294 = vmatpush1.msra.mxu0 0.0
    %1295 = vmatprep.subr.mxu0 0.0
    %1296 = vmatpush1.msra.mxu0 0.0
    %1297 = vmatprep.subr.mxu0 0.0
    %1298 = vmatpush1.msra.mxu0 0.0
    %1299 = vmatprep.subr.mxu0 0.0
    %1300 = vmatpush1.msra.mxu0 0.0
    %1301 = vmatprep.subr.mxu0 0.0
    %1302 = vmatpush1.msra.mxu0 0.0
    %1303 = vmatprep.subr.mxu0 0.0
    %1304 = vmatpush1.msra.mxu0 0.0
    %1305 = vmatprep.mubr.f32.mxu0 0.0
    %1306 = vmatmul.mubr.f32.gmra.mrb[0].mxu0 %v1239
    %v1307 = vpop.f32.mrb[0].mxu0
    %v1308 = vadd.f32 0.0, %v1307
    %v1309 = vpop.f32.mrb[0].mxu0
    %1310 = vdwg.mxu0
    %1311 = vrot.lane.b32.xlu0 %v157, 120
    %v1312 = vpop.permute.xlu0 %1311
    %1313 = vrot.lane.b32.xlu0 %v157, 88
    %v1314 = vpop.permute.xlu0 %1313
    %v1315 = vsel %vm185, %v1312, 0
    %v1317 = vsel %vm185, %v1314, 0
    %1319 = vmatprep.subr.mxu0 0.0
    %1320 = vmatpush1.xpose.msra.mxu0 %v1317
    %1321 = vmatprep.subr.mxu0 0.0
    %1322 = vmatpush1.xpose.msra.mxu0 0.0
    %1323 = vmatprep.subr.mxu0 0.0
    %1324 = vmatpush1.xpose.msra.mxu0 0.0
    %1325 = vmatprep.subr.mxu0 0.0
    %1326 = vmatpush1.xpose.msra.mxu0 0.0
    %1327 = vmatprep.subr.mxu0 0.0
    %1328 = vmatpush1.xpose.msra.mxu0 0.0
    %1329 = vmatprep.subr.mxu0 0.0
    %1330 = vmatpush1.xpose.msra.mxu0 0.0
    %1331 = vmatprep.subr.mxu0 0.0
    %1332 = vmatpush1.xpose.msra.mxu0 0.0
    %1333 = vmatprep.subr.mxu0 0.0
    %1334 = vmatpush1.xpose.msra.mxu0 0.0
    %1335 = vmatprep.subr.mxu0 0.0
    %1336 = vmatpush1.xpose.msra.mxu0 0.0
    %1337 = vmatprep.subr.mxu0 0.0
    %1338 = vmatpush1.xpose.msra.mxu0 0.0
    %1339 = vmatprep.subr.mxu0 0.0
    %1340 = vmatpush1.xpose.msra.mxu0 0.0
    %1341 = vmatprep.subr.mxu0 0.0
    %1342 = vmatpush1.xpose.msra.mxu0 0.0
    %1343 = vmatprep.subr.mxu0 0.0
    %1344 = vmatpush1.xpose.msra.mxu0 0.0
    %1345 = vmatprep.subr.mxu0 0.0
    %1346 = vmatpush1.xpose.msra.mxu0 0.0
    %1347 = vmatprep.subr.mxu0 0.0
    %1348 = vmatpush1.xpose.msra.mxu0 0.0
    %1349 = vmatprep.subr.mxu0 0.0
    %1350 = vmatpush1.xpose.msra.mxu0 0.0
    %1351 = vmatprep.subr.mxu0 0.0
    %1352 = vmatpush1.xpose.msra.mxu0 0.0
    %1353 = vmatprep.subr.mxu0 0.0
    %1354 = vmatpush1.xpose.msra.mxu0 0.0
    %1355 = vmatprep.subr.mxu0 0.0
    %1356 = vmatpush1.xpose.msra.mxu0 0.0
    %1357 = vmatprep.subr.mxu0 0.0
    %1358 = vmatpush1.xpose.msra.mxu0 0.0
    %1359 = vmatprep.subr.mxu0 0.0
    %1360 = vmatpush1.xpose.msra.mxu0 0.0
    %1361 = vmatprep.subr.mxu0 0.0
    %1362 = vmatpush1.xpose.msra.mxu0 0.0
    %1363 = vmatprep.subr.mxu0 0.0
    %1364 = vmatpush1.xpose.msra.mxu0 0.0
    %1365 = vmatprep.subr.mxu0 0.0
    %1366 = vmatpush1.xpose.msra.mxu0 0.0
    %1367 = vmatprep.subr.mxu0 0.0
    %1368 = vmatpush1.xpose.msra.mxu0 0.0
    %1369 = vmatprep.subr.mxu0 0.0
    %1370 = vmatpush1.xpose.msra.mxu0 0.0
    %1371 = vmatprep.subr.mxu0 0.0
    %1372 = vmatpush1.xpose.msra.mxu0 0.0
    %1373 = vmatprep.subr.mxu0 0.0
    %1374 = vmatpush1.xpose.msra.mxu0 0.0
    %1375 = vmatprep.subr.mxu0 0.0
    %1376 = vmatpush1.xpose.msra.mxu0 0.0
    %1377 = vmatprep.subr.mxu0 0.0
    %1378 = vmatpush1.xpose.msra.mxu0 0.0
    %1379 = vmatprep.subr.mxu0 0.0
    %1380 = vmatpush1.xpose.msra.mxu0 0.0
    %1381 = vmatprep.subr.mxu0 0.0
    %1382 = vmatpush1.xpose.msra.mxu0 0.0
    %1383 = vmatprep.mubr.f32.mxu0 0.0
    %1384 = vmatmul.mubr.f32.gmra.mrb[0].mxu0 %v1315
    %v1385 = vpop.f32.mrb[0].mxu0
    %v1386 = vadd.f32 0.0, %v1385
    %v1387 = vpop.f32.mrb[0].mxu0
    %1388 = vdwg.mxu0
    %v1389 = vsel %vm1145, %v1386, -9e+15
    %v1390 = vsel %vm185, %v1389, -inf
    %1391 = vmax.xlane.f32.xlu0 %v1390
    %v1392 = vpop.xlane.xlu0 %1391
    %v1393 = vsub.f32 %v1389, %v1392
    %v1394 = vmul.f32 %v1393, 1.442695
    %v1395 = vpow.pop %v1394
    %v1396 = vsel %vm185, %v1395, 0.0
    %1397 = vadd.xlane.f32.xlu0 %v1396
    %v1398 = vpop.xlane.xlu0 %1397
    %v1399 = vrcp.pop %v1398
    %v1400 = vmul.f32 %v1395, %v1399
    %1401 = vrot.lane.b32.xlu0 %v157, 56
    %v1402 = vpop.permute.xlu0 %1401
    %v1405 = vsel %vm185, %v1400, 0
    %1407 = vmatprep.subr.mxu0 0.0
    %1408 = vmatpush1.msra.mxu0 %v1402
    %1409 = vmatprep.subr.mxu0 0.0
    %1410 = vmatpush1.msra.mxu0 0.0
    %1411 = vmatprep.subr.mxu0 0.0
    %1412 = vmatpush1.msra.mxu0 0.0
    %1413 = vmatprep.subr.mxu0 0.0
    %1414 = vmatpush1.msra.mxu0 0.0
    %1415 = vmatprep.subr.mxu0 0.0
    %1416 = vmatpush1.msra.mxu0 0.0
    %1417 = vmatprep.subr.mxu0 0.0
    %1418 = vmatpush1.msra.mxu0 0.0
    %1419 = vmatprep.subr.mxu0 0.0
    %1420 = vmatpush1.msra.mxu0 0.0
    %1421 = vmatprep.subr.mxu0 0.0
    %1422 = vmatpush1.msra.mxu0 0.0
    %1423 = vmatprep.subr.mxu0 0.0
    %1424 = vmatpush1.msra.mxu0 0.0
    %1425 = vmatprep.subr.mxu0 0.0
    %1426 = vmatpush1.msra.mxu0 0.0
    %1427 = vmatprep.subr.mxu0 0.0
    %1428 = vmatpush1.msra.mxu0 0.0
    %1429 = vmatprep.subr.mxu0 0.0
    %1430 = vmatpush1.msra.mxu0 0.0
    %1431 = vmatprep.subr.mxu0 0.0
    %1432 = vmatpush1.msra.mxu0 0.0
    %1433 = vmatprep.subr.mxu0 0.0
    %1434 = vmatpush1.msra.mxu0 0.0
    %1435 = vmatprep.subr.mxu0 0.0
    %1436 = vmatpush1.msra.mxu0 0.0
    %1437 = vmatprep.subr.mxu0 0.0
    %1438 = vmatpush1.msra.mxu0 0.0
    %1439 = vmatprep.subr.mxu0 0.0
    %1440 = vmatpush1.msra.mxu0 0.0
    %1441 = vmatprep.subr.mxu0 0.0
    %1442 = vmatpush1.msra.mxu0 0.0
    %1443 = vmatprep.subr.mxu0 0.0
    %1444 = vmatpush1.msra.mxu0 0.0
    %1445 = vmatprep.subr.mxu0 0.0
    %1446 = vmatpush1.msra.mxu0 0.0
    %1447 = vmatprep.subr.mxu0 0.0
    %1448 = vmatpush1.msra.mxu0 0.0
    %1449 = vmatprep.subr.mxu0 0.0
    %1450 = vmatpush1.msra.mxu0 0.0
    %1451 = vmatprep.subr.mxu0 0.0
    %1452 = vmatpush1.msra.mxu0 0.0
    %1453 = vmatprep.subr.mxu0 0.0
    %1454 = vmatpush1.msra.mxu0 0.0
    %1455 = vmatprep.subr.mxu0 0.0
    %1456 = vmatpush1.msra.mxu0 0.0
    %1457 = vmatprep.subr.mxu0 0.0
    %1458 = vmatpush1.msra.mxu0 0.0
    %1459 = vmatprep.subr.mxu0 0.0
    %1460 = vmatpush1.msra.mxu0 0.0
    %1461 = vmatprep.subr.mxu0 0.0
    %1462 = vmatpush1.msra.mxu0 0.0
    %1463 = vmatprep.subr.mxu0 0.0
    %1464 = vmatpush1.msra.mxu0 0.0
    %1465 = vmatprep.subr.mxu0 0.0
    %1466 = vmatpush1.msra.mxu0 0.0
    %1467 = vmatprep.subr.mxu0 0.0
    %1468 = vmatpush1.msra.mxu0 0.0
    %1469 = vmatprep.subr.mxu0 0.0
    %1470 = vmatpush1.msra.mxu0 0.0
    %1471 = vmatprep.mubr.f32.mxu0 0.0
    %1472 = vmatmul.mubr.f32.gmra.mrb[0].mxu0 %v1405
    %v1473 = vpop.f32.mrb[0].mxu0
    %v1474 = vadd.f32 0.0, %v1473
    %v1475 = vpop.f32.mrb[0].mxu0
    %1476 = vdwg.mxu0
    %v1478 = vsel %vm185, %v1474, 0
    %1480 = vmatprep.subr.mxu0 0.0
    %1481 = vmatpush1.msra.mxu0 %v161
    %1482 = vmatprep.subr.mxu0 0.0
    %1483 = vmatpush1.msra.mxu0 0.0
    %1484 = vmatprep.subr.mxu0 0.0
    %1485 = vmatpush1.msra.mxu0 0.0
    %1486 = vmatprep.subr.mxu0 0.0
    %1487 = vmatpush1.msra.mxu0 0.0
    %1488 = vmatprep.subr.mxu0 0.0
    %1489 = vmatpush1.msra.mxu0 0.0
    %1490 = vmatprep.subr.mxu0 0.0
    %1491 = vmatpush1.msra.mxu0 0.0
    %1492 = vmatprep.subr.mxu0 0.0
    %1493 = vmatpush1.msra.mxu0 0.0
    %1494 = vmatprep.subr.mxu0 0.0
    %1495 = vmatpush1.msra.mxu0 0.0
    %1496 = vmatprep.subr.mxu0 0.0
    %1497 = vmatpush1.msra.mxu0 0.0
    %1498 = vmatprep.subr.mxu0 0.0
    %1499 = vmatpush1.msra.mxu0 0.0
    %1500 = vmatprep.subr.mxu0 0.0
    %1501 = vmatpush1.msra.mxu0 0.0
    %1502 = vmatprep.subr.mxu0 0.0
    %1503 = vmatpush1.msra.mxu0 0.0
    %1504 = vmatprep.subr.mxu0 0.0
    %1505 = vmatpush1.msra.mxu0 0.0
    %1506 = vmatprep.subr.mxu0 0.0
    %1507 = vmatpush1.msra.mxu0 0.0
    %1508 = vmatprep.subr.mxu0 0.0
    %1509 = vmatpush1.msra.mxu0 0.0
    %1510 = vmatprep.subr.mxu0 0.0
    %1511 = vmatpush1.msra.mxu0 0.0
    %1512 = vmatprep.subr.mxu0 0.0
    %1513 = vmatpush1.msra.mxu0 0.0
    %1514 = vmatprep.subr.mxu0 0.0
    %1515 = vmatpush1.msra.mxu0 0.0
    %1516 = vmatprep.subr.mxu0 0.0
    %1517 = vmatpush1.msra.mxu0 0.0
    %1518 = vmatprep.subr.mxu0 0.0
    %1519 = vmatpush1.msra.mxu0 0.0
    %1520 = vmatprep.subr.mxu0 0.0
    %1521 = vmatpush1.msra.mxu0 0.0
    %1522 = vmatprep.subr.mxu0 0.0
    %1523 = vmatpush1.msra.mxu0 0.0
    %1524 = vmatprep.subr.mxu0 0.0
    %1525 = vmatpush1.msra.mxu0 0.0
    %1526 = vmatprep.subr.mxu0 0.0
    %1527 = vmatpush1.msra.mxu0 0.0
    %1528 = vmatprep.subr.mxu0 0.0
    %1529 = vmatpush1.msra.mxu0 0.0
    %1530 = vmatprep.subr.mxu0 0.0
    %1531 = vmatpush1.msra.mxu0 0.0
    %1532 = vmatprep.subr.mxu0 0.0
    %1533 = vmatpush1.msra.mxu0 0.0
    %1534 = vmatprep.subr.mxu0 0.0
    %1535 = vmatpush1.msra.mxu0 0.0
    %1536 = vmatprep.subr.mxu0 0.0
    %1537 = vmatpush1.msra.mxu0 0.0
    %1538 = vmatprep.subr.mxu0 0.0
    %1539 = vmatpush1.msra.mxu0 0.0
    %1540 = vmatprep.subr.mxu0 0.0
    %1541 = vmatpush1.msra.mxu0 0.0
    %1542 = vmatprep.subr.mxu0 0.0
    %1543 = vmatpush1.msra.mxu0 0.0
    %1544 = vmatprep.mubr.f32.mxu0 0.0
    %1545 = vmatmul.mubr.f32.gmra.mrb[0].mxu0 %v1478
    %v1546 = vpop.f32.mrb[0].mxu0
    %v1547 = vadd.f32 0.0, %v1546
    %v1548 = vpop.f32.mrb[0].mxu0
    %1549 = vdwg.mxu0
    %v1551 = vsel %vm185, %v1308, 0
    %1553 = vmatprep.subr.mxu0 0.0
    %1554 = vmatpush1.msra.mxu0 %v160
    %1555 = vmatprep.subr.mxu0 0.0
    %1556 = vmatpush1.msra.mxu0 0.0
    %1557 = vmatprep.subr.mxu0 0.0
    %1558 = vmatpush1.msra.mxu0 0.0
    %1559 = vmatprep.subr.mxu0 0.0
    %1560 = vmatpush1.msra.mxu0 0.0
    %1561 = vmatprep.subr.mxu0 0.0
    %1562 = vmatpush1.msra.mxu0 0.0
    %1563 = vmatprep.subr.mxu0 0.0
    %1564 = vmatpush1.msra.mxu0 0.0
    %1565 = vmatprep.subr.mxu0 0.0
    %1566 = vmatpush1.msra.mxu0 0.0
    %1567 = vmatprep.subr.mxu0 0.0
    %1568 = vmatpush1.msra.mxu0 0.0
    %1569 = vmatprep.subr.mxu0 0.0
    %1570 = vmatpush1.msra.mxu0 0.0
    %1571 = vmatprep.subr.mxu0 0.0
    %1572 = vmatpush1.msra.mxu0 0.0
    %1573 = vmatprep.subr.mxu0 0.0
    %1574 = vmatpush1.msra.mxu0 0.0
    %1575 = vmatprep.subr.mxu0 0.0
    %1576 = vmatpush1.msra.mxu0 0.0
    %1577 = vmatprep.subr.mxu0 0.0
    %1578 = vmatpush1.msra.mxu0 0.0
    %1579 = vmatprep.subr.mxu0 0.0
    %1580 = vmatpush1.msra.mxu0 0.0
    %1581 = vmatprep.subr.mxu0 0.0
    %1582 = vmatpush1.msra.mxu0 0.0
    %1583 = vmatprep.subr.mxu0 0.0
    %1584 = vmatpush1.msra.mxu0 0.0
    %1585 = vmatprep.subr.mxu0 0.0
    %1586 = vmatpush1.msra.mxu0 0.0
    %1587 = vmatprep.subr.mxu0 0.0
    %1588 = vmatpush1.msra.mxu0 0.0
    %1589 = vmatprep.subr.mxu0 0.0
    %1590 = vmatpush1.msra.mxu0 0.0
    %1591 = vmatprep.subr.mxu0 0.0
    %1592 = vmatpush1.msra.mxu0 0.0
    %1593 = vmatprep.subr.mxu0 0.0
    %1594 = vmatpush1.msra.mxu0 0.0
    %1595 = vmatprep.subr.mxu0 0.0
    %1596 = vmatpush1.msra.mxu0 0.0
    %1597 = vmatprep.subr.mxu0 0.0
    %1598 = vmatpush1.msra.mxu0 0.0
    %1599 = vmatprep.subr.mxu0 0.0
    %1600 = vmatpush1.msra.mxu0 0.0
    %1601 = vmatprep.subr.mxu0 0.0
    %1602 = vmatpush1.msra.mxu0 0.0
    %1603 = vmatprep.subr.mxu0 0.0
    %1604 = vmatpush1.msra.mxu0 0.0
    %1605 = vmatprep.subr.mxu0 0.0
    %1606 = vmatpush1.msra.mxu0 0.0
    %1607 = vmatprep.subr.mxu0 0.0
    %1608 = vmatpush1.msra.mxu0 0.0
    %1609 = vmatprep.subr.mxu0 0.0
    %1610 = vmatpush1.msra.mxu0 0.0
    %1611 = vmatprep.subr.mxu0 0.0
    %1612 = vmatpush1.msra.mxu0 0.0
    %1613 = vmatprep.subr.mxu0 0.0
    %1614 = vmatpush1.msra.mxu0 0.0
    %1615 = vmatprep.subr.mxu0 0.0
    %1616 = vmatpush1.msra.mxu0 0.0
    %1617 = vmatprep.mubr.f32.mxu0 0.0
    %1618 = vmatmul.mubr.f32.gmra.mrb[0].mxu0 %v1551
    %v1619 = vpop.f32.mrb[0].mxu0
    %v1620 = vadd.f32 %v1547, %v1619
    %v1621 = vpop.f32.mrb[0].mxu0
    %1622 = vdwg.mxu0
    %1623 = vrot.lane.b32.xlu0 %v157, 112
    %v1624 = vpop.permute.xlu0 %1623
    %1625 = vrot.lane.b32.xlu0 %v157, 80
    %v1626 = vpop.permute.xlu0 %1625
    %v1627 = vsel %vm185, %v1624, 0
    %v1629 = vsel %vm185, %v1626, 0
    %1631 = vmatprep.subr.mxu0 0.0
    %1632 = vmatpush1.xpose.msra.mxu0 %v1629
    %1633 = vmatprep.subr.mxu0 0.0
    %1634 = vmatpush1.xpose.msra.mxu0 0.0
    %1635 = vmatprep.subr.mxu0 0.0
    %1636 = vmatpush1.xpose.msra.mxu0 0.0
    %1637 = vmatprep.subr.mxu0 0.0
    %1638 = vmatpush1.xpose.msra.mxu0 0.0
    %1639 = vmatprep.subr.mxu0 0.0
    %1640 = vmatpush1.xpose.msra.mxu0 0.0
    %1641 = vmatprep.subr.mxu0 0.0
    %1642 = vmatpush1.xpose.msra.mxu0 0.0
    %1643 = vmatprep.subr.mxu0 0.0
    %1644 = vmatpush1.xpose.msra.mxu0 0.0
    %1645 = vmatprep.subr.mxu0 0.0
    %1646 = vmatpush1.xpose.msra.mxu0 0.0
    %1647 = vmatprep.subr.mxu0 0.0
    %1648 = vmatpush1.xpose.msra.mxu0 0.0
    %1649 = vmatprep.subr.mxu0 0.0
    %1650 = vmatpush1.xpose.msra.mxu0 0.0
    %1651 = vmatprep.subr.mxu0 0.0
    %1652 = vmatpush1.xpose.msra.mxu0 0.0
    %1653 = vmatprep.subr.mxu0 0.0
    %1654 = vmatpush1.xpose.msra.mxu0 0.0
    %1655 = vmatprep.subr.mxu0 0.0
    %1656 = vmatpush1.xpose.msra.mxu0 0.0
    %1657 = vmatprep.subr.mxu0 0.0
    %1658 = vmatpush1.xpose.msra.mxu0 0.0
    %1659 = vmatprep.subr.mxu0 0.0
    %1660 = vmatpush1.xpose.msra.mxu0 0.0
    %1661 = vmatprep.subr.mxu0 0.0
    %1662 = vmatpush1.xpose.msra.mxu0 0.0
    %1663 = vmatprep.subr.mxu0 0.0
    %1664 = vmatpush1.xpose.msra.mxu0 0.0
    %1665 = vmatprep.subr.mxu0 0.0
    %1666 = vmatpush1.xpose.msra.mxu0 0.0
    %1667 = vmatprep.subr.mxu0 0.0
    %1668 = vmatpush1.xpose.msra.mxu0 0.0
    %1669 = vmatprep.subr.mxu0 0.0
    %1670 = vmatpush1.xpose.msra.mxu0 0.0
    %1671 = vmatprep.subr.mxu0 0.0
    %1672 = vmatpush1.xpose.msra.mxu0 0.0
    %1673 = vmatprep.subr.mxu0 0.0
    %1674 = vmatpush1.xpose.msra.mxu0 0.0
    %1675 = vmatprep.subr.mxu0 0.0
    %1676 = vmatpush1.xpose.msra.mxu0 0.0
    %1677 = vmatprep.subr.mxu0 0.0
    %1678 = vmatpush1.xpose.msra.mxu0 0.0
    %1679 = vmatprep.subr.mxu0 0.0
    %1680 = vmatpush1.xpose.msra.mxu0 0.0
    %1681 = vmatprep.subr.mxu0 0.0
    %1682 = vmatpush1.xpose.msra.mxu0 0.0
    %1683 = vmatprep.subr.mxu0 0.0
    %1684 = vmatpush1.xpose.msra.mxu0 0.0
    %1685 = vmatprep.subr.mxu0 0.0
    %1686 = vmatpush1.xpose.msra.mxu0 0.0
    %1687 = vmatprep.subr.mxu0 0.0
    %1688 = vmatpush1.xpose.msra.mxu0 0.0
    %1689 = vmatprep.subr.mxu0 0.0
    %1690 = vmatpush1.xpose.msra.mxu0 0.0
    %1691 = vmatprep.subr.mxu0 0.0
    %1692 = vmatpush1.xpose.msra.mxu0 0.0
    %1693 = vmatprep.subr.mxu0 0.0
    %1694 = vmatpush1.xpose.msra.mxu0 0.0
    %1695 = vmatprep.mubr.f32.mxu0 0.0
    %1696 = vmatmul.mubr.f32.gmra.mrb[0].mxu0 %v1627
    %v1697 = vpop.f32.mrb[0].mxu0
    %v1698 = vadd.f32 0.0, %v1697
    %v1699 = vpop.f32.mrb[0].mxu0
    %1700 = vdwg.mxu0
    %v1701 = vsel %vm1145, %v1698, -9e+15
    %v1702 = vsel %vm185, %v1701, -inf
    %1703 = vmax.xlane.f32.xlu0 %v1702
    %v1704 = vpop.xlane.xlu0 %1703
    %v1705 = vsub.f32 %v1701, %v1704
    %v1706 = vmul.f32 %v1705, 1.442695
    %v1707 = vpow.pop %v1706
    %v1708 = vsel %vm185, %v1707, 0.0
    %1709 = vadd.xlane.f32.xlu0 %v1708
    %v1710 = vpop.xlane.xlu0 %1709
    %v1711 = vrcp.pop %v1710
    %v1712 = vmul.f32 %v1707, %v1711
    %1713 = vrot.lane.b32.xlu0 %v157, 48
    %v1714 = vpop.permute.xlu0 %1713
    %v1717 = vsel %vm185, %v1712, 0
    %1719 = vmatprep.subr.mxu0 0.0
    %1720 = vmatpush1.msra.mxu0 %v1714
    %1721 = vmatprep.subr.mxu0 0.0
    %1722 = vmatpush1.msra.mxu0 0.0
    %1723 = vmatprep.subr.mxu0 0.0
    %1724 = vmatpush1.msra.mxu0 0.0
    %1725 = vmatprep.subr.mxu0 0.0
    %1726 = vmatpush1.msra.mxu0 0.0
    %1727 = vmatprep.subr.mxu0 0.0
    %1728 = vmatpush1.msra.mxu0 0.0
    %1729 = vmatprep.subr.mxu0 0.0
    %1730 = vmatpush1.msra.mxu0 0.0
    %1731 = vmatprep.subr.mxu0 0.0
    %1732 = vmatpush1.msra.mxu0 0.0
    %1733 = vmatprep.subr.mxu0 0.0
    %1734 = vmatpush1.msra.mxu0 0.0
    %1735 = vmatprep.subr.mxu0 0.0
    %1736 = vmatpush1.msra.mxu0 0.0
    %1737 = vmatprep.subr.mxu0 0.0
    %1738 = vmatpush1.msra.mxu0 0.0
    %1739 = vmatprep.subr.mxu0 0.0
    %1740 = vmatpush1.msra.mxu0 0.0
    %1741 = vmatprep.subr.mxu0 0.0
    %1742 = vmatpush1.msra.mxu0 0.0
    %1743 = vmatprep.subr.mxu0 0.0
    %1744 = vmatpush1.msra.mxu0 0.0
    %1745 = vmatprep.subr.mxu0 0.0
    %1746 = vmatpush1.msra.mxu0 0.0
    %1747 = vmatprep.subr.mxu0 0.0
    %1748 = vmatpush1.msra.mxu0 0.0
    %1749 = vmatprep.subr.mxu0 0.0
    %1750 = vmatpush1.msra.mxu0 0.0
    %1751 = vmatprep.subr.mxu0 0.0
    %1752 = vmatpush1.msra.mxu0 0.0
    %1753 = vmatprep.subr.mxu0 0.0
    %1754 = vmatpush1.msra.mxu0 0.0
    %1755 = vmatprep.subr.mxu0 0.0
    %1756 = vmatpush1.msra.mxu0 0.0
    %1757 = vmatprep.subr.mxu0 0.0
    %1758 = vmatpush1.msra.mxu0 0.0
    %1759 = vmatprep.subr.mxu0 0.0
    %1760 = vmatpush1.msra.mxu0 0.0
    %1761 = vmatprep.subr.mxu0 0.0
    %1762 = vmatpush1.msra.mxu0 0.0
    %1763 = vmatprep.subr.mxu0 0.0
    %1764 = vmatpush1.msra.mxu0 0.0
    %1765 = vmatprep.subr.mxu0 0.0
    %1766 = vmatpush1.msra.mxu0 0.0
    %1767 = vmatprep.subr.mxu0 0.0
    %1768 = vmatpush1.msra.mxu0 0.0
    %1769 = vmatprep.subr.mxu0 0.0
    %1770 = vmatpush1.msra.mxu0 0.0
    %1771 = vmatprep.subr.mxu0 0.0
    %1772 = vmatpush1.msra.mxu0 0.0
    %1773 = vmatprep.subr.mxu0 0.0
    %1774 = vmatpush1.msra.mxu0 0.0
    %1775 = vmatprep.subr.mxu0 0.0
    %1776 = vmatpush1.msra.mxu0 0.0
    %1777 = vmatprep.subr.mxu0 0.0
    %1778 = vmatpush1.msra.mxu0 0.0
    %1779 = vmatprep.subr.mxu0 0.0
    %1780 = vmatpush1.msra.mxu0 0.0
    %1781 = vmatprep.subr.mxu0 0.0
    %1782 = vmatpush1.msra.mxu0 0.0
    %1783 = vmatprep.mubr.f32.mxu0 0.0
    %1784 = vmatmul.mubr.f32.gmra.mrb[0].mxu0 %v1717
    %v1785 = vpop.f32.mrb[0].mxu0
    %v1786 = vadd.f32 0.0, %v1785
    %v1787 = vpop.f32.mrb[0].mxu0
    %1788 = vdwg.mxu0
    %v1790 = vsel %vm185, %v1786, 0
    %1792 = vmatprep.subr.mxu0 0.0
    %1793 = vmatpush1.msra.mxu0 %v162
    %1794 = vmatprep.subr.mxu0 0.0
    %1795 = vmatpush1.msra.mxu0 0.0
    %1796 = vmatprep.subr.mxu0 0.0
    %1797 = vmatpush1.msra.mxu0 0.0
    %1798 = vmatprep.subr.mxu0 0.0
    %1799 = vmatpush1.msra.mxu0 0.0
    %1800 = vmatprep.subr.mxu0 0.0
    %1801 = vmatpush1.msra.mxu0 0.0
    %1802 = vmatprep.subr.mxu0 0.0
    %1803 = vmatpush1.msra.mxu0 0.0
    %1804 = vmatprep.subr.mxu0 0.0
    %1805 = vmatpush1.msra.mxu0 0.0
    %1806 = vmatprep.subr.mxu0 0.0
    %1807 = vmatpush1.msra.mxu0 0.0
    %1808 = vmatprep.subr.mxu0 0.0
    %1809 = vmatpush1.msra.mxu0 0.0
    %1810 = vmatprep.subr.mxu0 0.0
    %1811 = vmatpush1.msra.mxu0 0.0
    %1812 = vmatprep.subr.mxu0 0.0
    %1813 = vmatpush1.msra.mxu0 0.0
    %1814 = vmatprep.subr.mxu0 0.0
    %1815 = vmatpush1.msra.mxu0 0.0
    %1816 = vmatprep.subr.mxu0 0.0
    %1817 = vmatpush1.msra.mxu0 0.0
    %1818 = vmatprep.subr.mxu0 0.0
    %1819 = vmatpush1.msra.mxu0 0.0
    %1820 = vmatprep.subr.mxu0 0.0
    %1821 = vmatpush1.msra.mxu0 0.0
    %1822 = vmatprep.subr.mxu0 0.0
    %1823 = vmatpush1.msra.mxu0 0.0
    %1824 = vmatprep.subr.mxu0 0.0
    %1825 = vmatpush1.msra.mxu0 0.0
    %1826 = vmatprep.subr.mxu0 0.0
    %1827 = vmatpush1.msra.mxu0 0.0
    %1828 = vmatprep.subr.mxu0 0.0
    %1829 = vmatpush1.msra.mxu0 0.0
    %1830 = vmatprep.subr.mxu0 0.0
    %1831 = vmatpush1.msra.mxu0 0.0
    %1832 = vmatprep.subr.mxu0 0.0
    %1833 = vmatpush1.msra.mxu0 0.0
    %1834 = vmatprep.subr.mxu0 0.0
    %1835 = vmatpush1.msra.mxu0 0.0
    %1836 = vmatprep.subr.mxu0 0.0
    %1837 = vmatpush1.msra.mxu0 0.0
    %1838 = vmatprep.subr.mxu0 0.0
    %1839 = vmatpush1.msra.mxu0 0.0
    %1840 = vmatprep.subr.mxu0 0.0
    %1841 = vmatpush1.msra.mxu0 0.0
    %1842 = vmatprep.subr.mxu0 0.0
    %1843 = vmatpush1.msra.mxu0 0.0
    %1844 = vmatprep.subr.mxu0 0.0
    %1845 = vmatpush1.msra.mxu0 0.0
    %1846 = vmatprep.subr.mxu0 0.0
    %1847 = vmatpush1.msra.mxu0 0.0
    %1848 = vmatprep.subr.mxu0 0.0
    %1849 = vmatpush1.msra.mxu0 0.0
    %1850 = vmatprep.subr.mxu0 0.0
    %1851 = vmatpush1.msra.mxu0 0.0
    %1852 = vmatprep.subr.mxu0 0.0
    %1853 = vmatpush1.msra.mxu0 0.0
    %1854 = vmatprep.subr.mxu0 0.0
    %1855 = vmatpush1.msra.mxu0 0.0
    %1856 = vmatprep.mubr.f32.mxu0 0.0
    %1857 = vmatmul.mubr.f32.gmra.mrb[0].mxu0 %v1790
    %v1858 = vpop.f32.mrb[0].mxu0
    %v1859 = vadd.f32 0.0, %v1858
    %v1860 = vpop.f32.mrb[0].mxu0
    %1861 = vdwg.mxu0
    %v1862 = vadd.f32 %v1620, %v1859
    %1863 = vrot.lane.b32.xlu0 %v157, 104
    %v1864 = vpop.permute.xlu0 %1863
    %1865 = vrot.lane.b32.xlu0 %v157, 72
    %v1866 = vpop.permute.xlu0 %1865
    %v1867 = vsel %vm185, %v1864, 0
    %v1869 = vsel %vm185, %v1866, 0
    %1871 = vmatprep.subr.mxu0 0.0
    %1872 = vmatpush1.xpose.msra.mxu0 %v1869
    %1873 = vmatprep.subr.mxu0 0.0
    %1874 = vmatpush1.xpose.msra.mxu0 0.0
    %1875 = vmatprep.subr.mxu0 0.0
    %1876 = vmatpush1.xpose.msra.mxu0 0.0
    %1877 = vmatprep.subr.mxu0 0.0
    %1878 = vmatpush1.xpose.msra.mxu0 0.0
    %1879 = vmatprep.subr.mxu0 0.0
    %1880 = vmatpush1.xpose.msra.mxu0 0.0
    %1881 = vmatprep.subr.mxu0 0.0
    %1882 = vmatpush1.xpose.msra.mxu0 0.0
    %1883 = vmatprep.subr.mxu0 0.0
    %1884 = vmatpush1.xpose.msra.mxu0 0.0
    %1885 = vmatprep.subr.mxu0 0.0
    %1886 = vmatpush1.xpose.msra.mxu0 0.0
    %1887 = vmatprep.subr.mxu0 0.0
    %1888 = vmatpush1.xpose.msra.mxu0 0.0
    %1889 = vmatprep.subr.mxu0 0.0
    %1890 = vmatpush1.xpose.msra.mxu0 0.0
    %1891 = vmatprep.subr.mxu0 0.0
    %1892 = vmatpush1.xpose.msra.mxu0 0.0
    %1893 = vmatprep.subr.mxu0 0.0
    %1894 = vmatpush1.xpose.msra.mxu0 0.0
    %1895 = vmatprep.subr.mxu0 0.0
    %1896 = vmatpush1.xpose.msra.mxu0 0.0
    %1897 = vmatprep.subr.mxu0 0.0
    %1898 = vmatpush1.xpose.msra.mxu0 0.0
    %1899 = vmatprep.subr.mxu0 0.0
    %1900 = vmatpush1.xpose.msra.mxu0 0.0
    %1901 = vmatprep.subr.mxu0 0.0
    %1902 = vmatpush1.xpose.msra.mxu0 0.0
    %1903 = vmatprep.subr.mxu0 0.0
    %1904 = vmatpush1.xpose.msra.mxu0 0.0
    %1905 = vmatprep.subr.mxu0 0.0
    %1906 = vmatpush1.xpose.msra.mxu0 0.0
    %1907 = vmatprep.subr.mxu0 0.0
    %1908 = vmatpush1.xpose.msra.mxu0 0.0
    %1909 = vmatprep.subr.mxu0 0.0
    %1910 = vmatpush1.xpose.msra.mxu0 0.0
    %1911 = vmatprep.subr.mxu0 0.0
    %1912 = vmatpush1.xpose.msra.mxu0 0.0
    %1913 = vmatprep.subr.mxu0 0.0
    %1914 = vmatpush1.xpose.msra.mxu0 0.0
    %1915 = vmatprep.subr.mxu0 0.0
    %1916 = vmatpush1.xpose.msra.mxu0 0.0
    %1917 = vmatprep.subr.mxu0 0.0
    %1918 = vmatpush1.xpose.msra.mxu0 0.0
    %1919 = vmatprep.subr.mxu0 0.0
    %1920 = vmatpush1.xpose.msra.mxu0 0.0
    %1921 = vmatprep.subr.mxu0 0.0
    %1922 = vmatpush1.xpose.msra.mxu0 0.0
    %1923 = vmatprep.subr.mxu0 0.0
    %1924 = vmatpush1.xpose.msra.mxu0 0.0
    %1925 = vmatprep.subr.mxu0 0.0
    %1926 = vmatpush1.xpose.msra.mxu0 0.0
    %1927 = vmatprep.subr.mxu0 0.0
    %1928 = vmatpush1.xpose.msra.mxu0 0.0
    %1929 = vmatprep.subr.mxu0 0.0
    %1930 = vmatpush1.xpose.msra.mxu0 0.0
    %1931 = vmatprep.subr.mxu0 0.0
    %1932 = vmatpush1.xpose.msra.mxu0 0.0
    %1933 = vmatprep.subr.mxu0 0.0
    %1934 = vmatpush1.xpose.msra.mxu0 0.0
    %1935 = vmatprep.mubr.f32.mxu0 0.0
    %1936 = vmatmul.mubr.f32.gmra.mrb[0].mxu0 %v1867
    %v1937 = vpop.f32.mrb[0].mxu0
    %v1938 = vadd.f32 0.0, %v1937
    %v1939 = vpop.f32.mrb[0].mxu0
    %1940 = vdwg.mxu0
    %v1941 = vsel %vm1145, %v1938, -9e+15
    %v1942 = vsel %vm185, %v1941, -inf
    %1943 = vmax.xlane.f32.xlu0 %v1942
    %v1944 = vpop.xlane.xlu0 %1943
    %v1945 = vsub.f32 %v1941, %v1944
    %v1946 = vmul.f32 %v1945, 1.442695
    %v1947 = vpow.pop %v1946
    %v1948 = vsel %vm185, %v1947, 0.0
    %1949 = vadd.xlane.f32.xlu0 %v1948
    %v1950 = vpop.xlane.xlu0 %1949
    %v1951 = vrcp.pop %v1950
    %v1952 = vmul.f32 %v1947, %v1951
    %1953 = vrot.lane.b32.xlu0 %v157, 40
    %v1954 = vpop.permute.xlu0 %1953
    %v1957 = vsel %vm185, %v1952, 0
    %1959 = vmatprep.subr.mxu0 0.0
    %1960 = vmatpush1.msra.mxu0 %v1954
    %1961 = vmatprep.subr.mxu0 0.0
    %1962 = vmatpush1.msra.mxu0 0.0
    %1963 = vmatprep.subr.mxu0 0.0
    %1964 = vmatpush1.msra.mxu0 0.0
    %1965 = vmatprep.subr.mxu0 0.0
    %1966 = vmatpush1.msra.mxu0 0.0
    %1967 = vmatprep.subr.mxu0 0.0
    %1968 = vmatpush1.msra.mxu0 0.0
    %1969 = vmatprep.subr.mxu0 0.0
    %1970 = vmatpush1.msra.mxu0 0.0
    %1971 = vmatprep.subr.mxu0 0.0
    %1972 = vmatpush1.msra.mxu0 0.0
    %1973 = vmatprep.subr.mxu0 0.0
    %1974 = vmatpush1.msra.mxu0 0.0
    %1975 = vmatprep.subr.mxu0 0.0
    %1976 = vmatpush1.msra.mxu0 0.0
    %1977 = vmatprep.subr.mxu0 0.0
    %1978 = vmatpush1.msra.mxu0 0.0
    %1979 = vmatprep.subr.mxu0 0.0
    %1980 = vmatpush1.msra.mxu0 0.0
    %1981 = vmatprep.subr.mxu0 0.0
    %1982 = vmatpush1.msra.mxu0 0.0
    %1983 = vmatprep.subr.mxu0 0.0
    %1984 = vmatpush1.msra.mxu0 0.0
    %1985 = vmatprep.subr.mxu0 0.0
    %1986 = vmatpush1.msra.mxu0 0.0
    %1987 = vmatprep.subr.mxu0 0.0
    %1988 = vmatpush1.msra.mxu0 0.0
    %1989 = vmatprep.subr.mxu0 0.0
    %1990 = vmatpush1.msra.mxu0 0.0
    %1991 = vmatprep.subr.mxu0 0.0
    %1992 = vmatpush1.msra.mxu0 0.0
    %1993 = vmatprep.subr.mxu0 0.0
    %1994 = vmatpush1.msra.mxu0 0.0
    %1995 = vmatprep.subr.mxu0 0.0
    %1996 = vmatpush1.msra.mxu0 0.0
    %1997 = vmatprep.subr.mxu0 0.0
    %1998 = vmatpush1.msra.mxu0 0.0
    %1999 = vmatprep.subr.mxu0 0.0
    %2000 = vmatpush1.msra.mxu0 0.0
    %2001 = vmatprep.subr.mxu0 0.0
    %2002 = vmatpush1.msra.mxu0 0.0
    %2003 = vmatprep.subr.mxu0 0.0
    %2004 = vmatpush1.msra.mxu0 0.0
    %2005 = vmatprep.subr.mxu0 0.0
    %2006 = vmatpush1.msra.mxu0 0.0
    %2007 = vmatprep.subr.mxu0 0.0
    %2008 = vmatpush1.msra.mxu0 0.0
    %2009 = vmatprep.subr.mxu0 0.0
    %2010 = vmatpush1.msra.mxu0 0.0
    %2011 = vmatprep.subr.mxu0 0.0
    %2012 = vmatpush1.msra.mxu0 0.0
    %2013 = vmatprep.subr.mxu0 0.0
    %2014 = vmatpush1.msra.mxu0 0.0
    %2015 = vmatprep.subr.mxu0 0.0
    %2016 = vmatpush1.msra.mxu0 0.0
    %2017 = vmatprep.subr.mxu0 0.0
    %2018 = vmatpush1.msra.mxu0 0.0
    %2019 = vmatprep.subr.mxu0 0.0
    %2020 = vmatpush1.msra.mxu0 0.0
    %2021 = vmatprep.subr.mxu0 0.0
    %2022 = vmatpush1.msra.mxu0 0.0
    %2023 = vmatprep.mubr.f32.mxu0 0.0
    %2024 = vmatmul.mubr.f32.gmra.mrb[0].mxu0 %v1957
    %v2025 = vpop.f32.mrb[0].mxu0
    %v2026 = vadd.f32 0.0, %v2025
    %v2027 = vpop.f32.mrb[0].mxu0
    %2028 = vdwg.mxu0
    %v2030 = vsel %vm185, %v2026, 0
    %2032 = vmatprep.subr.mxu0 0.0
    %2033 = vmatpush1.msra.mxu0 %v163
    %2034 = vmatprep.subr.mxu0 0.0
    %2035 = vmatpush1.msra.mxu0 0.0
    %2036 = vmatprep.subr.mxu0 0.0
    %2037 = vmatpush1.msra.mxu0 0.0
    %2038 = vmatprep.subr.mxu0 0.0
    %2039 = vmatpush1.msra.mxu0 0.0
    %2040 = vmatprep.subr.mxu0 0.0
    %2041 = vmatpush1.msra.mxu0 0.0
    %2042 = vmatprep.subr.mxu0 0.0
    %2043 = vmatpush1.msra.mxu0 0.0
    %2044 = vmatprep.subr.mxu0 0.0
    %2045 = vmatpush1.msra.mxu0 0.0
    %2046 = vmatprep.subr.mxu0 0.0
    %2047 = vmatpush1.msra.mxu0 0.0
    %2048 = vmatprep.subr.mxu0 0.0
    %2049 = vmatpush1.msra.mxu0 0.0
    %2050 = vmatprep.subr.mxu0 0.0
    %2051 = vmatpush1.msra.mxu0 0.0
    %2052 = vmatprep.subr.mxu0 0.0
    %2053 = vmatpush1.msra.mxu0 0.0
    %2054 = vmatprep.subr.mxu0 0.0
    %2055 = vmatpush1.msra.mxu0 0.0
    %2056 = vmatprep.subr.mxu0 0.0
    %2057 = vmatpush1.msra.mxu0 0.0
    %2058 = vmatprep.subr.mxu0 0.0
    %2059 = vmatpush1.msra.mxu0 0.0
    %2060 = vmatprep.subr.mxu0 0.0
    %2061 = vmatpush1.msra.mxu0 0.0
    %2062 = vmatprep.subr.mxu0 0.0
    %2063 = vmatpush1.msra.mxu0 0.0
    %2064 = vmatprep.subr.mxu0 0.0
    %2065 = vmatpush1.msra.mxu0 0.0
    %2066 = vmatprep.subr.mxu0 0.0
    %2067 = vmatpush1.msra.mxu0 0.0
    %2068 = vmatprep.subr.mxu0 0.0
    %2069 = vmatpush1.msra.mxu0 0.0
    %2070 = vmatprep.subr.mxu0 0.0
    %2071 = vmatpush1.msra.mxu0 0.0
    %2072 = vmatprep.subr.mxu0 0.0
    %2073 = vmatpush1.msra.mxu0 0.0
    %2074 = vmatprep.subr.mxu0 0.0
    %2075 = vmatpush1.msra.mxu0 0.0
    %2076 = vmatprep.subr.mxu0 0.0
    %2077 = vmatpush1.msra.mxu0 0.0
    %2078 = vmatprep.subr.mxu0 0.0
    %2079 = vmatpush1.msra.mxu0 0.0
    %2080 = vmatprep.subr.mxu0 0.0
    %2081 = vmatpush1.msra.mxu0 0.0
    %2082 = vmatprep.subr.mxu0 0.0
    %2083 = vmatpush1.msra.mxu0 0.0
    %2084 = vmatprep.subr.mxu0 0.0
    %2085 = vmatpush1.msra.mxu0 0.0
    %2086 = vmatprep.subr.mxu0 0.0
    %2087 = vmatpush1.msra.mxu0 0.0
    %2088 = vmatprep.subr.mxu0 0.0
    %2089 = vmatpush1.msra.mxu0 0.0
    %2090 = vmatprep.subr.mxu0 0.0
    %2091 = vmatpush1.msra.mxu0 0.0
    %2092 = vmatprep.subr.mxu0 0.0
    %2093 = vmatpush1.msra.mxu0 0.0
    %2094 = vmatprep.subr.mxu0 0.0
    %2095 = vmatpush1.msra.mxu0 0.0
    %2096 = vmatprep.mubr.f32.mxu0 0.0
    %2097 = vmatmul.mubr.f32.gmra.mrb[0].mxu0 %v2030
    %v2098 = vpop.f32.mrb[0].mxu0
    %v2099 = vadd.f32 0.0, %v2098
    %v2100 = vpop.f32.mrb[0].mxu0
    %2101 = vdwg.mxu0
    %v2102 = vadd.f32 %v1862, %v2099
    %v2103 = vld [vmem:[%s5] sm:$0x1]
    %v2105 = vlaneseq
    %v2106 = vshrl.u32 %v2105, 7
    %v2107 = vsub.s32 0, %v2106
    %v2108 = vrot.slane %v2103, %v2107
    %v2110 = vadd.f32 %v1139, %v2108
    %v2111 = vadd.f32 %v2102, %v2108
    %2112 = vst.msk [vmem:[#allocation8] sm:$0xff] %vm78, %v2110
    %2113 = vst.msk [vmem:[#allocation8 + $0x8] sm:$0xff] %vm78, %v2111
    // Predicated region
    $region38: #{tpu_custom_call.1} parent=1 // pred_check
      _
    $region39: #{tpu_custom_call.1} parent=1 // pred_check_branch
      %2115 = sbr.rel (0) target = $region41
    $region40: #{tpu_custom_call.1} parent=1 // pred_region
      %s2117 = ssub.s32 256, 256
      %2118 = vsyncadd [#allocation4], %s2117
      %s2119 = sshll.u32 [#allocation8], 4
      %s2120 = int_to_ptr.vmem [resolvable:$true] %s2119
      %2125 = dma.vmem_to_hbm [thread:$0]  %s2120, 256, %s6, [#allocation4], 128, 128, 8
    $region41: #{tpu_custom_call.1} parent=1 // pred_fallthru
      _
    // Predicated region
    $region42: #{tpu_custom_call.1} parent=1 // pred_check
      _
    $region43: #{tpu_custom_call.1} parent=1 // pred_check_branch
      %2127 = sbr.rel (0) target = $region45
    $region44: #{tpu_custom_call.1} parent=1 // pred_region
      %2128 = dma.done [#allocation4], 256
    $region45: #{tpu_custom_call.1} parent=1 // pred_fallthru
      _
    %2129 = vsyncpa [#allocation3], 1
    %2130 = vsyncpa [#allocation6], 1
    %2131 = vsyncpa [#allocation4], 1

</llo_original>
